<compile_context>
chip_gen: v7x
topology: tpu7x:2x2x1
jax: 0.10.0
libtpu: 0.0.40
codegen_flags: <defaults>
</compile_context>

<pallas_src>
import jax
import jax.numpy as jnp
import numpy as np
from jax import lax
from jax.experimental import pallas as pl
from jax.experimental.pallas import tpu as pltpu


def _make_decoder_kernel(num_layers, hidden_size, time_chunk, batch_block, d_in):
    L, H, Tc, BB, D = num_layers, hidden_size, time_chunk, batch_block, d_in
    G = 4 * H

    def _cell(gates, c_prev):
        # Gate order [i, f, o, g]; the i/f/o pre-activations were pre-scaled by
        # 0.5 host-side, so one full-width tanh gives sigmoid as 0.5*t + 0.5.
        t = jnp.tanh(gates)                       # single EUP pass over 4H
        i_g = 0.5 * t[:, 0:H] + 0.5
        f_g = 0.5 * t[:, H:2 * H] + 0.5
        o_g = 0.5 * t[:, 2 * H:3 * H] + 0.5
        g_g = t[:, 3 * H:4 * H]
        c_new = f_g * c_prev + i_g * g_g
        h_new = o_g * jnp.tanh(c_new)
        return h_new, c_new

    def kernel(*refs):
        # inputs: x, wih0^T, b0, h0, c0, whh0^T, (wih_l^T, whh_l^T, b_l) for l>=1
        # outputs: hout, hn, cn
        # scratch: xg_scr, h_scr, c_scr
        idx = 0
        x_ref = refs[idx]; idx += 1          # (Tc, BB, D)   raw inputs for this chunk
        wih0_ref = refs[idx]; idx += 1       # (D, 4H)
        b0_ref = refs[idx]; idx += 1         # (1, 4H)
        h0_ref = refs[idx]; idx += 1         # (L, BB, H)
        c0_ref = refs[idx]; idx += 1         # (L, BB, H)
        whh0_ref = refs[idx]; idx += 1       # (H, 4H)
        deep = []
        for _ in range(L - 1):
            deep.append((refs[idx], refs[idx + 1], refs[idx + 2]))  # (H,4H),(H,4H),(1,4H)
            idx += 3
        hout_ref = refs[idx]; idx += 1       # (Tc, BB, H)  top-layer hidden per step
        hn_ref = refs[idx]; idx += 1         # (L, BB, H)
        cn_ref = refs[idx]; idx += 1         # (L, BB, H)
        xg_scr = refs[idx]; idx += 1         # (Tc, BB, 4H) VMEM gates scratch
        h_scr = refs[idx]; idx += 1          # (L, BB, H)   VMEM persistent state
        c_scr = refs[idx]; idx += 1          # (L, BB, H)   VMEM persistent state

        t_chunk = pl.program_id(1)

        # Load the initial hidden/cell state into scratch at the first chunk.
        @pl.when(t_chunk == 0)
        def _():
            h_scr[...] = h0_ref[...]
            c_scr[...] = c0_ref[...]

        # ---- per-chunk (off the recurrence critical path): layer-0 x projection ----
        x2d = x_ref[...].reshape(Tc * BB, D)
        xg = jnp.dot(x2d, wih0_ref[...],
                     preferred_element_type=jnp.float32) + b0_ref[...]
        xg_scr[...] = xg.reshape(Tc, BB, G)

        # ---- hoist invariant weight loads / bias broadcasts out of the time loop ----
        whh0 = whh0_ref[...]
        deep_w = [(wih_ref[...], whh_ref[...],
                   jnp.broadcast_to(b_ref[...], (BB, G)))
                  for (wih_ref, whh_ref, b_ref) in deep]

        h_init = tuple(h_scr[l] for l in range(L))
        c_init = tuple(c_scr[l] for l in range(L))

        # ---- recurrence: state carried in vregs, fully unrolled over the chunk ----
        def step(tt, carry):
            hs, cs = carry
            # layer 0 (input projection already in xg_scr)
            gates0 = xg_scr[tt] + jnp.dot(hs[0], whh0,
                                          preferred_element_type=jnp.float32)
            h_new, c_new = _cell(gates0, cs[0])
            new_h = [h_new]
            new_c = [c_new]
            x = h_new
            # layers >= 1: split x / h matmuls (no lane concat on the critical path)
            for li, (wih, whh, b) in enumerate(deep_w, start=1):
                gates = (jnp.dot(x, wih, preferred_element_type=jnp.float32)
                         + jnp.dot(hs[li], whh, preferred_element_type=jnp.float32)
                         + b)
                h_new, c_new = _cell(gates, cs[li])
                new_h.append(h_new)
                new_c.append(c_new)
                x = h_new
            hout_ref[tt] = x                 # top-layer hidden for this step
            return (tuple(new_h), tuple(new_c))

        h_fin, c_fin = lax.fori_loop(0, Tc, step, (h_init, c_init), unroll=True)

        # Write the state back to scratch once per chunk.
        for l in range(L):
            h_scr[l] = h_fin[l]
            c_scr[l] = c_fin[l]

        # Emit the final (h_n, c_n) at the last time chunk.
        @pl.when(t_chunk == pl.num_programs(1) - 1)
        def _():
            hn_ref[...] = h_scr[...]
            cn_ref[...] = c_scr[...]

    return kernel


def decoder_with_ft_forward(params, encoder_representation, hidden_state, token,
                            time_chunk=None):
    """JAX/Pallas equivalent of DecoderWithFT.forward.

    encoder_representation: (B, T, input_size) float32
    hidden_state: (h0, c0), each (num_layers, B, hidden_size) float32
    token: (B, T) any numeric dtype
    returns (results (B, T, output_size), (h_n, c_n))
    """
    h0, c0 = hidden_state
    L = params["num_layers"]
    H = params["hidden_size"]
    G = 4 * H

    # torch.cat([enc, token.float().unsqueeze(-1)], dim=2)
    x = jnp.concatenate(
        [encoder_representation, token.astype(jnp.float32)[..., None]], axis=2)
    B, T, D_in = x.shape

    # --- pad batch to the f32 sublane width (8) ---
    B_pad = ((B + 7) // 8) * 8
    pad_b = B_pad - B
    if pad_b:
        x = jnp.pad(x, ((0, pad_b), (0, 0), (0, 0)))
        h0 = jnp.pad(h0, ((0, 0), (0, pad_b), (0, 0)))
        c0 = jnp.pad(c0, ((0, 0), (0, pad_b), (0, 0)))

    x_tm = jnp.transpose(x, (1, 0, 2))                           # (T, B_pad, D_in)

    # --- batch block: keep the parallel grid axis splittable (v7x megacore) ---
    if B_pad >= 16:
        BB = min(128, ((B_pad // 2) // 8) * 8)
        while B_pad % BB != 0:
            BB -= 8
        BB = max(BB, 8)
    else:
        BB = B_pad
    num_bb = B_pad // BB

    # --- gate reorder [i, f, o, g] + fold the 0.5 (tanh-sigmoid) scaling into weights ---
    perm = np.concatenate([np.arange(0, 2 * H),        # i, f
                           np.arange(3 * H, 4 * H),    # o
                           np.arange(2 * H, 3 * H)])   # g
    scale = np.concatenate([np.full(3 * H, 0.5, np.float32),
                            np.ones(H, np.float32)])

    def _prep(l):
        wih = params["w_ih"][l][perm] * scale[:, None]           # (4H, d_l)
        whh = params["w_hh"][l][perm] * scale[:, None]           # (4H, H)
        b = ((params["b_ih"][l] + params["b_hh"][l])[perm] * scale).reshape(1, G)
        return wih.T, whh.T, b                                   # (d_l,4H), (H,4H), (1,4H)

    wih0_T, whh0_T, b0 = _prep(0)

    deep_weights = []
    deep_specs = []
    for l in range(1, L):
        wih_T, whh_T, b = _prep(l)
        deep_weights += [wih_T, whh_T, b]
        deep_specs += [
            pl.BlockSpec((H, G), lambda bb, t: (0, 0)),
            pl.BlockSpec((H, G), lambda bb, t: (0, 0)),
            pl.BlockSpec((1, G), lambda bb, t: (0, 0)),
        ]

    # --- VMEM estimate for a candidate time chunk (drives chunk choice + limit) ---
    def _vmem_bytes(tc):
        words = (2 * tc * BB * D_in            # x input, double-buffered
                 + 2 * tc * BB * H             # hout output, double-buffered
                 + 4 * L * BB * H              # h0, c0 blocks
                 + 4 * L * BB * H              # hn, cn blocks
                 + tc * BB * G                 # xg scratch
                 + 2 * L * BB * H              # h/c scratch
                 + D_in * G + H * G + G        # layer-0 weights
                 + (L - 1) * (2 * H * G + G))  # deep-layer weights
        return words * 4

    # --- time chunking: largest divisor of T (<=32) that fits a conservative budget ---
    if time_chunk is None:
        time_chunk = 1
        for cand in range(min(T, 32), 0, -1):
            if T % cand == 0 and _vmem_bytes(cand) <= 24 * 1024 * 1024:
                time_chunk = cand
                break
    assert T % time_chunk == 0, "time_chunk must divide T"
    Tc = time_chunk
    num_tc = T // Tc

    vmem_limit = int(min(100 * 1024 * 1024,
                         max(32 * 1024 * 1024, 2 * _vmem_bytes(Tc))))

    kernel = _make_decoder_kernel(L, H, Tc, BB, D_in)

    hout_tm, hn, cn = pl.pallas_call(
        kernel,
        out_shape=(
            jax.ShapeDtypeStruct((T, B_pad, H), jnp.float32),     # top hidden per step
            jax.ShapeDtypeStruct((L, B_pad, H), jnp.float32),     # h_n
            jax.ShapeDtypeStruct((L, B_pad, H), jnp.float32),     # c_n
        ),
        grid_spec=pltpu.PrefetchScalarGridSpec(
            num_scalar_prefetch=0,
            grid=(num_bb, num_tc),
            in_specs=[
                pl.BlockSpec((Tc, BB, D_in), lambda bb, t: (t, bb, 0)),   # x chunk
                pl.BlockSpec((D_in, G), lambda bb, t: (0, 0)),            # Wih0^T
                pl.BlockSpec((1, G), lambda bb, t: (0, 0)),               # b0
                pl.BlockSpec((L, BB, H), lambda bb, t: (0, bb, 0)),       # h0
                pl.BlockSpec((L, BB, H), lambda bb, t: (0, bb, 0)),       # c0
                pl.BlockSpec((H, G), lambda bb, t: (0, 0)),               # Whh0^T
            ] + deep_specs,
            out_specs=[
                pl.BlockSpec((Tc, BB, H), lambda bb, t: (t, bb, 0)),      # hidden out
                pl.BlockSpec((L, BB, H), lambda bb, t: (0, bb, 0)),       # h_n
                pl.BlockSpec((L, BB, H), lambda bb, t: (0, bb, 0)),       # c_n
            ],
            scratch_shapes=[
                pltpu.VMEM((Tc, BB, G), jnp.float32),                     # chunk gates
                pltpu.VMEM((L, BB, H), jnp.float32),                      # h state
                pltpu.VMEM((L, BB, H), jnp.float32),                      # c state
            ],
        ),
        compiler_params=pltpu.CompilerParams(
            dimension_semantics=("parallel", "arbitrary"),
            vmem_limit_bytes=vmem_limit),
    )(x_tm, wih0_T, b0, h0, c0, whh0_T, *deep_weights)

    # --- hoisted output Linear over the whole sequence (one big lane-dense matmul) ---
    # TODO(synk): optional bf16 cast of hout/w_out on v6e/v7x (kept f32 for tolerance).
    results = jnp.einsum("tbh,oh->bto", hout_tm, params["w_out"]) + params["b_out"]
    results = results[:B]                                         # drop batch padding
    return results, (hn[:, :B, :], cn[:, :B, :])


def _init_params(key, input_size, hidden_size, num_layers, output_size):
    """Deterministic init mimicking PyTorch defaults: U(-1/sqrt(H), 1/sqrt(H))."""
    H = hidden_size
    k = 1.0 / np.sqrt(H)
    params = {
        "num_layers": num_layers,
        "hidden_size": H,
        "output_size": output_size,
        "w_ih": [], "w_hh": [], "b_ih": [], "b_hh": [],
    }
    for l in range(num_layers):
        d_l = (input_size + 1) if l == 0 else H
        key, k1, k2, k3, k4 = jax.random.split(key, 5)
        params["w_ih"].append(jax.random.uniform(k1, (4 * H, d_l), jnp.float32, -k, k))
        params["w_hh"].append(jax.random.uniform(k2, (4 * H, H), jnp.float32, -k, k))
        params["b_ih"].append(jax.random.uniform(k3, (4 * H,), jnp.float32, -k, k))
        params["b_hh"].append(jax.random.uniform(k4, (4 * H,), jnp.float32, -k, k))
    key, k1, k2 = jax.random.split(key, 3)
    kl = 1.0 / np.sqrt(H)
    params["w_out"] = jax.random.uniform(k1, (output_size, H), jnp.float32, -kl, kl)
    params["b_out"] = jax.random.uniform(k2, (output_size,), jnp.float32, -kl, kl)
    return params


def _reference_forward(params, enc, hidden_state, token):
    """Pure-JAX reference of the PyTorch forward (for correctness check)."""
    H = params["hidden_size"]
    L = params["num_layers"]
    h0, c0 = hidden_state
    x = jnp.concatenate([enc, token.astype(jnp.float32)[..., None]], axis=2)
    B, T, _ = x.shape
    h = [h0[l] for l in range(L)]
    c = [c0[l] for l in range(L)]
    outs = []
    for t in range(T):
        inp = x[:, t, :]
        for l in range(L):
            g = (inp @ params["w_ih"][l].T + params["b_ih"][l]
                 + h[l] @ params["w_hh"][l].T + params["b_hh"][l])
            i_g = jax.nn.sigmoid(g[:, 0:H])
            f_g = jax.nn.sigmoid(g[:, H:2 * H])
            g_g = jnp.tanh(g[:, 2 * H:3 * H])
            o_g = jax.nn.sigmoid(g[:, 3 * H:4 * H])
            c[l] = f_g * c[l] + i_g * g_g
            h[l] = o_g * jnp.tanh(c[l])
            inp = h[l]
        outs.append(inp @ params["w_out"].T + params["b_out"])
    return jnp.stack(outs, axis=1), (jnp.stack(h), jnp.stack(c))


if __name__ == "__main__":
    # Small shapes consistent with the module's forward.
    B, T = 2, 8
    input_size, hidden_size, num_layers, output_size = 4, 32, 2, 4

    key = jax.random.PRNGKey(0)
    key, kp, ke, kh, kc, kt = jax.random.split(key, 6)

    params = _init_params(kp, input_size, hidden_size, num_layers, output_size)

    encoder_representation = jax.random.normal(ke, (B, T, input_size), jnp.float32)
    h0 = jax.random.normal(kh, (num_layers, B, hidden_size), jnp.float32)
    c0 = jax.random.normal(kc, (num_layers, B, hidden_size), jnp.float32)
    token = jax.random.randint(kt, (B, T), 0, 10)   # integer tokens, cast to float in forward

    ref_results, (ref_hn, ref_cn) = _reference_forward(
        params, encoder_representation, (h0, c0), token)

    # Run with multiple time chunks (exercises state carry across the grid)
    # and with the full sequence in a single chunk.
    for tc in (4, None):
        results, (h_n, c_n) = decoder_with_ft_forward(
            params, encoder_representation, (h0, c0), token, time_chunk=tc)
        jax.block_until_ready((results, h_n, c_n))

        np.testing.assert_allclose(np.asarray(results), np.asarray(ref_results),
                                   rtol=1e-4, atol=1e-4)
        np.testing.assert_allclose(np.asarray(h_n), np.asarray(ref_hn),
                                   rtol=1e-4, atol=1e-4)
        np.testing.assert_allclose(np.asarray(c_n), np.asarray(ref_cn),
                                   rtol=1e-4, atol=1e-4)

    # Second config with a larger batch: exercises batch padding and >1 batch block
    # on the parallel grid axis.
    B2 = 10
    key, ke2, kh2, kc2, kt2 = jax.random.split(key, 5)
    enc2 = jax.random.normal(ke2, (B2, T, input_size), jnp.float32)
    h02 = jax.random.normal(kh2, (num_layers, B2, hidden_size), jnp.float32)
    c02 = jax.random.normal(kc2, (num_layers, B2, hidden_size), jnp.float32)
    token2 = jax.random.randint(kt2, (B2, T), 0, 10)

    ref2, (ref_hn2, ref_cn2) = _reference_forward(params, enc2, (h02, c02), token2)
    res2, (hn2, cn2) = decoder_with_ft_forward(params, enc2, (h02, c02), token2)
    jax.block_until_ready((res2, hn2, cn2))

    np.testing.assert_allclose(np.asarray(res2), np.asarray(ref2), rtol=1e-4, atol=1e-4)
    np.testing.assert_allclose(np.asarray(hn2), np.asarray(ref_hn2), rtol=1e-4, atol=1e-4)
    np.testing.assert_allclose(np.asarray(cn2), np.asarray(ref_cn2), rtol=1e-4, atol=1e-4)

    print("KERNEL_OK")
</pallas_src>

<mosaic_0001>
module attributes {stable_mosaic.version = 11 : i64} {
  func.func @kernel(%arg0: i32, %arg1: i32, %arg2: memref<4x8x5xf32, #tpu.memory_space<vmem>>, %arg3: memref<5x128xf32, #tpu.memory_space<vmem>>, %arg4: memref<1x128xf32, #tpu.memory_space<vmem>>, %arg5: memref<2x8x32xf32, #tpu.memory_space<vmem>>, %arg6: memref<2x8x32xf32, #tpu.memory_space<vmem>>, %arg7: memref<32x128xf32, #tpu.memory_space<vmem>>, %arg8: memref<32x128xf32, #tpu.memory_space<vmem>>, %arg9: memref<32x128xf32, #tpu.memory_space<vmem>>, %arg10: memref<1x128xf32, #tpu.memory_space<vmem>>, %arg11: memref<4x8x32xf32, #tpu.memory_space<vmem>>, %arg12: memref<2x8x32xf32, #tpu.memory_space<vmem>>, %arg13: memref<2x8x32xf32, #tpu.memory_space<vmem>>, %arg14: memref<4x8x128xf32, #tpu.memory_space<vmem>>, %arg15: memref<2x8x32xf32, #tpu.memory_space<vmem>>, %arg16: memref<2x8x32xf32, #tpu.memory_space<vmem>>) attributes {dimension_semantics = [#tpu.dimension_semantics<parallel>, #tpu.dimension_semantics<arbitrary>], iteration_bounds = array<i64: 1, 2>, scalar_prefetch = 0 : i64, scratch_operands = 3 : i64, tpu.core_type = #tpu.core_type<tc>, window_params = [{transform_indices = @transform_0, window_bounds = array<i64: 4, 8, 5>}, {pipeline_mode = #tpu.pipeline_mode<synchronous>, transform_indices = @transform_1, window_bounds = array<i64: 5, 128>}, {pipeline_mode = #tpu.pipeline_mode<synchronous>, transform_indices = @transform_2, window_bounds = array<i64: 1, 128>}, {transform_indices = @transform_3, window_bounds = array<i64: 2, 8, 32>}, {transform_indices = @transform_4, window_bounds = array<i64: 2, 8, 32>}, {pipeline_mode = #tpu.pipeline_mode<synchronous>, transform_indices = @transform_5, window_bounds = array<i64: 32, 128>}, {pipeline_mode = #tpu.pipeline_mode<synchronous>, transform_indices = @transform_6, window_bounds = array<i64: 32, 128>}, {pipeline_mode = #tpu.pipeline_mode<synchronous>, transform_indices = @transform_7, window_bounds = array<i64: 32, 128>}, {pipeline_mode = #tpu.pipeline_mode<synchronous>, transform_indices = @transform_8, window_bounds = array<i64: 1, 128>}, {transform_indices = @transform_9, window_bounds = array<i64: 4, 8, 32>}, {transform_indices = @transform_10, window_bounds = array<i64: 2, 8, 32>}, {transform_indices = @transform_11, window_bounds = array<i64: 2, 8, 32>}]} {
    %c0_i32 = arith.constant 0 : i32
    %0 = arith.cmpi eq, %arg1, %c0_i32 : i32
    %1 = arith.extui %0 : i1 to i32
    %c0_i32_0 = arith.constant 0 : i32
    %2 = arith.cmpi ne, %1, %c0_i32_0 : i32
    scf.if %2 {
      %c0_120 = arith.constant 0 : index
      %c0_121 = arith.constant 0 : index
      %c0_122 = arith.constant 0 : index
      %269 = vector.load %arg5[%c0_120, %c0_121, %c0_122] : memref<2x8x32xf32, #tpu.memory_space<vmem>>, vector<2x8x32xf32>
      %c0_123 = arith.constant 0 : index
      %c0_124 = arith.constant 0 : index
      %c0_125 = arith.constant 0 : index
      %270 = vector.load %arg15[%c0_123, %c0_124, %c0_125] : memref<2x8x32xf32, #tpu.memory_space<vmem>>, vector<2x8x32xf32>
      tpu.vector_store %arg15[%c0_123, %c0_124, %c0_125], %269 {strides = array<i32>} : memref<2x8x32xf32, #tpu.memory_space<vmem>>, vector<2x8x32xf32>,
      %c0_126 = arith.constant 0 : index
      %c0_127 = arith.constant 0 : index
      %c0_128 = arith.constant 0 : index
      %271 = vector.load %arg6[%c0_126, %c0_127, %c0_128] : memref<2x8x32xf32, #tpu.memory_space<vmem>>, vector<2x8x32xf32>
      %c0_129 = arith.constant 0 : index
      %c0_130 = arith.constant 0 : index
      %c0_131 = arith.constant 0 : index
      %272 = vector.load %arg16[%c0_129, %c0_130, %c0_131] : memref<2x8x32xf32, #tpu.memory_space<vmem>>, vector<2x8x32xf32>
      tpu.vector_store %arg16[%c0_129, %c0_130, %c0_131], %271 {strides = array<i32>} : memref<2x8x32xf32, #tpu.memory_space<vmem>>, vector<2x8x32xf32>,
    } else {
    }
    %c0 = arith.constant 0 : index
    %c0_1 = arith.constant 0 : index
    %c0_2 = arith.constant 0 : index
    %3 = vector.load %arg2[%c0, %c0_1, %c0_2] : memref<4x8x5xf32, #tpu.memory_space<vmem>>, vector<4x8x5xf32>
    %4 = vector.shape_cast %3 : vector<4x8x5xf32> to vector<32x5xf32>
    %c0_3 = arith.constant 0 : index
    %c0_4 = arith.constant 0 : index
    %5 = vector.load %arg3[%c0_3, %c0_4] : memref<5x128xf32, #tpu.memory_space<vmem>>, vector<5x128xf32>
    %cst = arith.constant dense<0.000000e+00> : vector<32x128xf32>
    %6 = tpu.matmul %4, %5, %cst {dimension_numbers = #tpu.dot_dimension_numbers<[1], [0], [0], [1], [0, 0, 1, 1], [], []>} : vector<32x5xf32>, vector<5x128xf32>, vector<32x128xf32> -> vector<32x128xf32>
    %c0_5 = arith.constant 0 : index
    %c0_6 = arith.constant 0 : index
    %7 = vector.load %arg4[%c0_5, %c0_6] : memref<1x128xf32, #tpu.memory_space<vmem>>, vector<1x128xf32>
    %8 = vector.broadcast %7 : vector<1x128xf32> to vector<32x128xf32>
    %9 = arith.addf %6, %8 : vector<32x128xf32>
    %10 = vector.shape_cast %9 : vector<32x128xf32> to vector<4x8x128xf32>
    %c0_7 = arith.constant 0 : index
    %c0_8 = arith.constant 0 : index
    %c0_9 = arith.constant 0 : index
    %11 = vector.load %arg14[%c0_7, %c0_8, %c0_9] : memref<4x8x128xf32, #tpu.memory_space<vmem>>, vector<4x8x128xf32>
    tpu.vector_store %arg14[%c0_7, %c0_8, %c0_9], %10 {strides = array<i32>} : memref<4x8x128xf32, #tpu.memory_space<vmem>>, vector<4x8x128xf32>,
    %c0_10 = arith.constant 0 : index
    %c0_11 = arith.constant 0 : index
    %12 = vector.load %arg7[%c0_10, %c0_11] : memref<32x128xf32, #tpu.memory_space<vmem>>, vector<32x128xf32>
    %c0_12 = arith.constant 0 : index
    %c0_13 = arith.constant 0 : index
    %13 = vector.load %arg8[%c0_12, %c0_13] : memref<32x128xf32, #tpu.memory_space<vmem>>, vector<32x128xf32>
    %c0_14 = arith.constant 0 : index
    %c0_15 = arith.constant 0 : index
    %14 = vector.load %arg9[%c0_14, %c0_15] : memref<32x128xf32, #tpu.memory_space<vmem>>, vector<32x128xf32>
    %c0_16 = arith.constant 0 : index
    %c0_17 = arith.constant 0 : index
    %15 = vector.load %arg10[%c0_16, %c0_17] : memref<1x128xf32, #tpu.memory_space<vmem>>, vector<1x128xf32>
    %16 = vector.shape_cast %15 : vector<1x128xf32> to vector<1x128xf32>
    %17 = vector.broadcast %16 : vector<1x128xf32> to vector<8x128xf32>
    %c0_18 = arith.constant 0 : index
    %c0_19 = arith.constant 0 : index
    %c0_20 = arith.constant 0 : index
    %18 = vector.load %arg15[%c0_18, %c0_19, %c0_20] : memref<2x8x32xf32, #tpu.memory_space<vmem>>, vector<1x8x32xf32>
    %19 = vector.shape_cast %18 : vector<1x8x32xf32> to vector<8x32xf32>
    %c1 = arith.constant 1 : index
    %c0_21 = arith.constant 0 : index
    %c0_22 = arith.constant 0 : index
    %20 = vector.load %arg15[%c1, %c0_21, %c0_22] : memref<2x8x32xf32, #tpu.memory_space<vmem>>, vector<1x8x32xf32>
    %21 = vector.shape_cast %20 : vector<1x8x32xf32> to vector<8x32xf32>
    %c0_23 = arith.constant 0 : index
    %c0_24 = arith.constant 0 : index
    %c0_25 = arith.constant 0 : index
    %22 = vector.load %arg16[%c0_23, %c0_24, %c0_25] : memref<2x8x32xf32, #tpu.memory_space<vmem>>, vector<1x8x32xf32>
    %23 = vector.shape_cast %22 : vector<1x8x32xf32> to vector<8x32xf32>
    %c1_26 = arith.constant 1 : index
    %c0_27 = arith.constant 0 : index
    %c0_28 = arith.constant 0 : index
    %24 = vector.load %arg16[%c1_26, %c0_27, %c0_28] : memref<2x8x32xf32, #tpu.memory_space<vmem>>, vector<1x8x32xf32>
    %25 = vector.shape_cast %24 : vector<1x8x32xf32> to vector<8x32xf32>
    %c0_i32_29 = arith.constant 0 : i32
    %26 = arith.index_cast %c0_i32_29 : i32 to index
    %c0_30 = arith.constant 0 : index
    %c0_31 = arith.constant 0 : index
    %27 = vector.load %arg14[%26, %c0_30, %c0_31] : memref<4x8x128xf32, #tpu.memory_space<vmem>>, vector<1x8x128xf32>
    %28 = vector.shape_cast %27 : vector<1x8x128xf32> to vector<8x128xf32>
    %cst_32 = arith.constant dense<0.000000e+00> : vector<8x128xf32>
    %29 = tpu.matmul %19, %12, %cst_32 {dimension_numbers = #tpu.dot_dimension_numbers<[1], [0], [0], [1], [0, 0, 1, 1], [], []>} : vector<8x32xf32>, vector<32x128xf32>, vector<8x128xf32> -> vector<8x128xf32>
    %30 = arith.addf %28, %29 : vector<8x128xf32>
    %31 = math.tanh %30 : vector<8x128xf32>
    %32 = vector.extract_strided_slice %31 {offsets = [0, 0], sizes = [8, 32], strides = [1, 1]} : vector<8x128xf32> to vector<8x32xf32>
    %cst_33 = arith.constant 5.000000e-01 : f32
    %33 = vector.broadcast %cst_33 : f32 to vector<8x32xf32>
    %34 = arith.mulf %33, %32 : vector<8x32xf32>
    %cst_34 = arith.constant 5.000000e-01 : f32
    %35 = vector.broadcast %cst_34 : f32 to vector<8x32xf32>
    %36 = arith.addf %34, %35 : vector<8x32xf32>
    %37 = vector.extract_strided_slice %31 {offsets = [0, 32], sizes = [8, 32], strides = [1, 1]} : vector<8x128xf32> to vector<8x32xf32>
    %cst_35 = arith.constant 5.000000e-01 : f32
    %38 = vector.broadcast %cst_35 : f32 to vector<8x32xf32>
    %39 = arith.mulf %38, %37 : vector<8x32xf32>
    %cst_36 = arith.constant 5.000000e-01 : f32
    %40 = vector.broadcast %cst_36 : f32 to vector<8x32xf32>
    %41 = arith.addf %39, %40 : vector<8x32xf32>
    %42 = vector.extract_strided_slice %31 {offsets = [0, 64], sizes = [8, 32], strides = [1, 1]} : vector<8x128xf32> to vector<8x32xf32>
    %cst_37 = arith.constant 5.000000e-01 : f32
    %43 = vector.broadcast %cst_37 : f32 to vector<8x32xf32>
    %44 = arith.mulf %43, %42 : vector<8x32xf32>
    %cst_38 = arith.constant 5.000000e-01 : f32
    %45 = vector.broadcast %cst_38 : f32 to vector<8x32xf32>
    %46 = arith.addf %44, %45 : vector<8x32xf32>
    %47 = vector.extract_strided_slice %31 {offsets = [0, 96], sizes = [8, 32], strides = [1, 1]} : vector<8x128xf32> to vector<8x32xf32>
    %48 = arith.mulf %41, %23 : vector<8x32xf32>
    %49 = arith.mulf %36, %47 : vector<8x32xf32>
    %50 = arith.addf %48, %49 : vector<8x32xf32>
    %51 = math.tanh %50 : vector<8x32xf32>
    %52 = arith.mulf %46, %51 : vector<8x32xf32>
    %cst_39 = arith.constant dense<0.000000e+00> : vector<8x128xf32>
    %53 = tpu.matmul %52, %13, %cst_39 {dimension_numbers = #tpu.dot_dimension_numbers<[1], [0], [0], [1], [0, 0, 1, 1], [], []>} : vector<8x32xf32>, vector<32x128xf32>, vector<8x128xf32> -> vector<8x128xf32>
    %cst_40 = arith.constant dense<0.000000e+00> : vector<8x128xf32>
    %54 = tpu.matmul %21, %14, %cst_40 {dimension_numbers = #tpu.dot_dimension_numbers<[1], [0], [0], [1], [0, 0, 1, 1], [], []>} : vector<8x32xf32>, vector<32x128xf32>, vector<8x128xf32> -> vector<8x128xf32>
    %55 = arith.addf %53, %54 : vector<8x128xf32>
    %56 = arith.addf %55, %17 : vector<8x128xf32>
    %57 = math.tanh %56 : vector<8x128xf32>
    %58 = vector.extract_strided_slice %57 {offsets = [0, 0], sizes = [8, 32], strides = [1, 1]} : vector<8x128xf32> to vector<8x32xf32>
    %cst_41 = arith.constant 5.000000e-01 : f32
    %59 = vector.broadcast %cst_41 : f32 to vector<8x32xf32>
    %60 = arith.mulf %59, %58 : vector<8x32xf32>
    %cst_42 = arith.constant 5.000000e-01 : f32
    %61 = vector.broadcast %cst_42 : f32 to vector<8x32xf32>
    %62 = arith.addf %60, %61 : vector<8x32xf32>
    %63 = vector.extract_strided_slice %57 {offsets = [0, 32], sizes = [8, 32], strides = [1, 1]} : vector<8x128xf32> to vector<8x32xf32>
    %cst_43 = arith.constant 5.000000e-01 : f32
    %64 = vector.broadcast %cst_43 : f32 to vector<8x32xf32>
    %65 = arith.mulf %64, %63 : vector<8x32xf32>
    %cst_44 = arith.constant 5.000000e-01 : f32
    %66 = vector.broadcast %cst_44 : f32 to vector<8x32xf32>
    %67 = arith.addf %65, %66 : vector<8x32xf32>
    %68 = vector.extract_strided_slice %57 {offsets = [0, 64], sizes = [8, 32], strides = [1, 1]} : vector<8x128xf32> to vector<8x32xf32>
    %cst_45 = arith.constant 5.000000e-01 : f32
    %69 = vector.broadcast %cst_45 : f32 to vector<8x32xf32>
    %70 = arith.mulf %69, %68 : vector<8x32xf32>
    %cst_46 = arith.constant 5.000000e-01 : f32
    %71 = vector.broadcast %cst_46 : f32 to vector<8x32xf32>
    %72 = arith.addf %70, %71 : vector<8x32xf32>
    %73 = vector.extract_strided_slice %57 {offsets = [0, 96], sizes = [8, 32], strides = [1, 1]} : vector<8x128xf32> to vector<8x32xf32>
    %74 = arith.mulf %67, %25 : vector<8x32xf32>
    %75 = arith.mulf %62, %73 : vector<8x32xf32>
    %76 = arith.addf %74, %75 : vector<8x32xf32>
    %77 = math.tanh %76 : vector<8x32xf32>
    %78 = arith.mulf %72, %77 : vector<8x32xf32>
    %79 = arith.index_cast %c0_i32_29 : i32 to index
    %c0_47 = arith.constant 0 : index
    %c0_48 = arith.constant 0 : index
    %80 = vector.load %arg11[%79, %c0_47, %c0_48] : memref<4x8x32xf32, #tpu.memory_space<vmem>>, vector<1x8x32xf32>
    %81 = vector.shape_cast %80 : vector<1x8x32xf32> to vector<8x32xf32>
    %82 = vector.shape_cast %78 : vector<8x32xf32> to vector<1x8x32xf32>
    tpu.vector_store %arg11[%79, %c0_47, %c0_48], %82 {strides = array<i32>} : memref<4x8x32xf32, #tpu.memory_space<vmem>>, vector<1x8x32xf32>,
    %c1_i32 = arith.constant 1 : i32
    %83 = arith.index_cast %c1_i32 : i32 to index
    %c0_49 = arith.constant 0 : index
    %c0_50 = arith.constant 0 : index
    %84 = vector.load %arg14[%83, %c0_49, %c0_50] : memref<4x8x128xf32, #tpu.memory_space<vmem>>, vector<1x8x128xf32>
    %85 = vector.shape_cast %84 : vector<1x8x128xf32> to vector<8x128xf32>
    %cst_51 = arith.constant dense<0.000000e+00> : vector<8x128xf32>
    %86 = tpu.matmul %52, %12, %cst_51 {dimension_numbers = #tpu.dot_dimension_numbers<[1], [0], [0], [1], [0, 0, 1, 1], [], []>} : vector<8x32xf32>, vector<32x128xf32>, vector<8x128xf32> -> vector<8x128xf32>
    %87 = arith.addf %85, %86 : vector<8x128xf32>
    %88 = math.tanh %87 : vector<8x128xf32>
    %89 = vector.extract_strided_slice %88 {offsets = [0, 0], sizes = [8, 32], strides = [1, 1]} : vector<8x128xf32> to vector<8x32xf32>
    %cst_52 = arith.constant 5.000000e-01 : f32
    %90 = vector.broadcast %cst_52 : f32 to vector<8x32xf32>
    %91 = arith.mulf %90, %89 : vector<8x32xf32>
    %cst_53 = arith.constant 5.000000e-01 : f32
    %92 = vector.broadcast %cst_53 : f32 to vector<8x32xf32>
    %93 = arith.addf %91, %92 : vector<8x32xf32>
    %94 = vector.extract_strided_slice %88 {offsets = [0, 32], sizes = [8, 32], strides = [1, 1]} : vector<8x128xf32> to vector<8x32xf32>
    %cst_54 = arith.constant 5.000000e-01 : f32
    %95 = vector.broadcast %cst_54 : f32 to vector<8x32xf32>
    %96 = arith.mulf %95, %94 : vector<8x32xf32>
    %cst_55 = arith.constant 5.000000e-01 : f32
    %97 = vector.broadcast %cst_55 : f32 to vector<8x32xf32>
    %98 = arith.addf %96, %97 : vector<8x32xf32>
    %99 = vector.extract_strided_slice %88 {offsets = [0, 64], sizes = [8, 32], strides = [1, 1]} : vector<8x128xf32> to vector<8x32xf32>
    %cst_56 = arith.constant 5.000000e-01 : f32
    %100 = vector.broadcast %cst_56 : f32 to vector<8x32xf32>
    %101 = arith.mulf %100, %99 : vector<8x32xf32>
    %cst_57 = arith.constant 5.000000e-01 : f32
    %102 = vector.broadcast %cst_57 : f32 to vector<8x32xf32>
    %103 = arith.addf %101, %102 : vector<8x32xf32>
    %104 = vector.extract_strided_slice %88 {offsets = [0, 96], sizes = [8, 32], strides = [1, 1]} : vector<8x128xf32> to vector<8x32xf32>
    %105 = arith.mulf %98, %50 : vector<8x32xf32>
    %106 = arith.mulf %93, %104 : vector<8x32xf32>
    %107 = arith.addf %105, %106 : vector<8x32xf32>
    %108 = math.tanh %107 : vector<8x32xf32>
    %109 = arith.mulf %103, %108 : vector<8x32xf32>
    %cst_58 = arith.constant dense<0.000000e+00> : vector<8x128xf32>
    %110 = tpu.matmul %109, %13, %cst_58 {dimension_numbers = #tpu.dot_dimension_numbers<[1], [0], [0], [1], [0, 0, 1, 1], [], []>} : vector<8x32xf32>, vector<32x128xf32>, vector<8x128xf32> -> vector<8x128xf32>
    %cst_59 = arith.constant dense<0.000000e+00> : vector<8x128xf32>
    %111 = tpu.matmul %78, %14, %cst_59 {dimension_numbers = #tpu.dot_dimension_numbers<[1], [0], [0], [1], [0, 0, 1, 1], [], []>} : vector<8x32xf32>, vector<32x128xf32>, vector<8x128xf32> -> vector<8x128xf32>
    %112 = arith.addf %110, %111 : vector<8x128xf32>
    %113 = arith.addf %112, %17 : vector<8x128xf32>
    %114 = math.tanh %113 : vector<8x128xf32>
    %115 = vector.extract_strided_slice %114 {offsets = [0, 0], sizes = [8, 32], strides = [1, 1]} : vector<8x128xf32> to vector<8x32xf32>
    %cst_60 = arith.constant 5.000000e-01 : f32
    %116 = vector.broadcast %cst_60 : f32 to vector<8x32xf32>
    %117 = arith.mulf %116, %115 : vector<8x32xf32>
    %cst_61 = arith.constant 5.000000e-01 : f32
    %118 = vector.broadcast %cst_61 : f32 to vector<8x32xf32>
    %119 = arith.addf %117, %118 : vector<8x32xf32>
    %120 = vector.extract_strided_slice %114 {offsets = [0, 32], sizes = [8, 32], strides = [1, 1]} : vector<8x128xf32> to vector<8x32xf32>
    %cst_62 = arith.constant 5.000000e-01 : f32
    %121 = vector.broadcast %cst_62 : f32 to vector<8x32xf32>
    %122 = arith.mulf %121, %120 : vector<8x32xf32>
    %cst_63 = arith.constant 5.000000e-01 : f32
    %123 = vector.broadcast %cst_63 : f32 to vector<8x32xf32>
    %124 = arith.addf %122, %123 : vector<8x32xf32>
    %125 = vector.extract_strided_slice %114 {offsets = [0, 64], sizes = [8, 32], strides = [1, 1]} : vector<8x128xf32> to vector<8x32xf32>
    %cst_64 = arith.constant 5.000000e-01 : f32
    %126 = vector.broadcast %cst_64 : f32 to vector<8x32xf32>
    %127 = arith.mulf %126, %125 : vector<8x32xf32>
    %cst_65 = arith.constant 5.000000e-01 : f32
    %128 = vector.broadcast %cst_65 : f32 to vector<8x32xf32>
    %129 = arith.addf %127, %128 : vector<8x32xf32>
    %130 = vector.extract_strided_slice %114 {offsets = [0, 96], sizes = [8, 32], strides = [1, 1]} : vector<8x128xf32> to vector<8x32xf32>
    %131 = arith.mulf %124, %76 : vector<8x32xf32>
    %132 = arith.mulf %119, %130 : vector<8x32xf32>
    %133 = arith.addf %131, %132 : vector<8x32xf32>
    %134 = math.tanh %133 : vector<8x32xf32>
    %135 = arith.mulf %129, %134 : vector<8x32xf32>
    %136 = arith.index_cast %c1_i32 : i32 to index
    %c0_66 = arith.constant 0 : index
    %c0_67 = arith.constant 0 : index
    %137 = vector.load %arg11[%136, %c0_66, %c0_67] : memref<4x8x32xf32, #tpu.memory_space<vmem>>, vector<1x8x32xf32>
    %138 = vector.shape_cast %137 : vector<1x8x32xf32> to vector<8x32xf32>
    %139 = vector.shape_cast %135 : vector<8x32xf32> to vector<1x8x32xf32>
    tpu.vector_store %arg11[%136, %c0_66, %c0_67], %139 {strides = array<i32>} : memref<4x8x32xf32, #tpu.memory_space<vmem>>, vector<1x8x32xf32>,
    %c2_i32 = arith.constant 2 : i32
    %140 = arith.index_cast %c2_i32 : i32 to index
    %c0_68 = arith.constant 0 : index
    %c0_69 = arith.constant 0 : index
    %141 = vector.load %arg14[%140, %c0_68, %c0_69] : memref<4x8x128xf32, #tpu.memory_space<vmem>>, vector<1x8x128xf32>
    %142 = vector.shape_cast %141 : vector<1x8x128xf32> to vector<8x128xf32>
    %cst_70 = arith.constant dense<0.000000e+00> : vector<8x128xf32>
    %143 = tpu.matmul %109, %12, %cst_70 {dimension_numbers = #tpu.dot_dimension_numbers<[1], [0], [0], [1], [0, 0, 1, 1], [], []>} : vector<8x32xf32>, vector<32x128xf32>, vector<8x128xf32> -> vector<8x128xf32>
    %144 = arith.addf %142, %143 : vector<8x128xf32>
    %145 = math.tanh %144 : vector<8x128xf32>
    %146 = vector.extract_strided_slice %145 {offsets = [0, 0], sizes = [8, 32], strides = [1, 1]} : vector<8x128xf32> to vector<8x32xf32>
    %cst_71 = arith.constant 5.000000e-01 : f32
    %147 = vector.broadcast %cst_71 : f32 to vector<8x32xf32>
    %148 = arith.mulf %147, %146 : vector<8x32xf32>
    %cst_72 = arith.constant 5.000000e-01 : f32
    %149 = vector.broadcast %cst_72 : f32 to vector<8x32xf32>
    %150 = arith.addf %148, %149 : vector<8x32xf32>
    %151 = vector.extract_strided_slice %145 {offsets = [0, 32], sizes = [8, 32], strides = [1, 1]} : vector<8x128xf32> to vector<8x32xf32>
    %cst_73 = arith.constant 5.000000e-01 : f32
    %152 = vector.broadcast %cst_73 : f32 to vector<8x32xf32>
    %153 = arith.mulf %152, %151 : vector<8x32xf32>
    %cst_74 = arith.constant 5.000000e-01 : f32
    %154 = vector.broadcast %cst_74 : f32 to vector<8x32xf32>
    %155 = arith.addf %153, %154 : vector<8x32xf32>
    %156 = vector.extract_strided_slice %145 {offsets = [0, 64], sizes = [8, 32], strides = [1, 1]} : vector<8x128xf32> to vector<8x32xf32>
    %cst_75 = arith.constant 5.000000e-01 : f32
    %157 = vector.broadcast %cst_75 : f32 to vector<8x32xf32>
    %158 = arith.mulf %157, %156 : vector<8x32xf32>
    %cst_76 = arith.constant 5.000000e-01 : f32
    %159 = vector.broadcast %cst_76 : f32 to vector<8x32xf32>
    %160 = arith.addf %158, %159 : vector<8x32xf32>
    %161 = vector.extract_strided_slice %145 {offsets = [0, 96], sizes = [8, 32], strides = [1, 1]} : vector<8x128xf32> to vector<8x32xf32>
    %162 = arith.mulf %155, %107 : vector<8x32xf32>
    %163 = arith.mulf %150, %161 : vector<8x32xf32>
    %164 = arith.addf %162, %163 : vector<8x32xf32>
    %165 = math.tanh %164 : vector<8x32xf32>
    %166 = arith.mulf %160, %165 : vector<8x32xf32>
    %cst_77 = arith.constant dense<0.000000e+00> : vector<8x128xf32>
    %167 = tpu.matmul %166, %13, %cst_77 {dimension_numbers = #tpu.dot_dimension_numbers<[1], [0], [0], [1], [0, 0, 1, 1], [], []>} : vector<8x32xf32>, vector<32x128xf32>, vector<8x128xf32> -> vector<8x128xf32>
    %cst_78 = arith.constant dense<0.000000e+00> : vector<8x128xf32>
    %168 = tpu.matmul %135, %14, %cst_78 {dimension_numbers = #tpu.dot_dimension_numbers<[1], [0], [0], [1], [0, 0, 1, 1], [], []>} : vector<8x32xf32>, vector<32x128xf32>, vector<8x128xf32> -> vector<8x128xf32>
    %169 = arith.addf %167, %168 : vector<8x128xf32>
    %170 = arith.addf %169, %17 : vector<8x128xf32>
    %171 = math.tanh %170 : vector<8x128xf32>
    %172 = vector.extract_strided_slice %171 {offsets = [0, 0], sizes = [8, 32], strides = [1, 1]} : vector<8x128xf32> to vector<8x32xf32>
    %cst_79 = arith.constant 5.000000e-01 : f32
    %173 = vector.broadcast %cst_79 : f32 to vector<8x32xf32>
    %174 = arith.mulf %173, %172 : vector<8x32xf32>
    %cst_80 = arith.constant 5.000000e-01 : f32
    %175 = vector.broadcast %cst_80 : f32 to vector<8x32xf32>
    %176 = arith.addf %174, %175 : vector<8x32xf32>
    %177 = vector.extract_strided_slice %171 {offsets = [0, 32], sizes = [8, 32], strides = [1, 1]} : vector<8x128xf32> to vector<8x32xf32>
    %cst_81 = arith.constant 5.000000e-01 : f32
    %178 = vector.broadcast %cst_81 : f32 to vector<8x32xf32>
    %179 = arith.mulf %178, %177 : vector<8x32xf32>
    %cst_82 = arith.constant 5.000000e-01 : f32
    %180 = vector.broadcast %cst_82 : f32 to vector<8x32xf32>
    %181 = arith.addf %179, %180 : vector<8x32xf32>
    %182 = vector.extract_strided_slice %171 {offsets = [0, 64], sizes = [8, 32], strides = [1, 1]} : vector<8x128xf32> to vector<8x32xf32>
    %cst_83 = arith.constant 5.000000e-01 : f32
    %183 = vector.broadcast %cst_83 : f32 to vector<8x32xf32>
    %184 = arith.mulf %183, %182 : vector<8x32xf32>
    %cst_84 = arith.constant 5.000000e-01 : f32
    %185 = vector.broadcast %cst_84 : f32 to vector<8x32xf32>
    %186 = arith.addf %184, %185 : vector<8x32xf32>
    %187 = vector.extract_strided_slice %171 {offsets = [0, 96], sizes = [8, 32], strides = [1, 1]} : vector<8x128xf32> to vector<8x32xf32>
    %188 = arith.mulf %181, %133 : vector<8x32xf32>
    %189 = arith.mulf %176, %187 : vector<8x32xf32>
    %190 = arith.addf %188, %189 : vector<8x32xf32>
    %191 = math.tanh %190 : vector<8x32xf32>
    %192 = arith.mulf %186, %191 : vector<8x32xf32>
    %193 = arith.index_cast %c2_i32 : i32 to index
    %c0_85 = arith.constant 0 : index
    %c0_86 = arith.constant 0 : index
    %194 = vector.load %arg11[%193, %c0_85, %c0_86] : memref<4x8x32xf32, #tpu.memory_space<vmem>>, vector<1x8x32xf32>
    %195 = vector.shape_cast %194 : vector<1x8x32xf32> to vector<8x32xf32>
    %196 = vector.shape_cast %192 : vector<8x32xf32> to vector<1x8x32xf32>
    tpu.vector_store %arg11[%193, %c0_85, %c0_86], %196 {strides = array<i32>} : memref<4x8x32xf32, #tpu.memory_space<vmem>>, vector<1x8x32xf32>,
    %c3_i32 = arith.constant 3 : i32
    %197 = arith.index_cast %c3_i32 : i32 to index
    %c0_87 = arith.constant 0 : index
    %c0_88 = arith.constant 0 : index
    %198 = vector.load %arg14[%197, %c0_87, %c0_88] : memref<4x8x128xf32, #tpu.memory_space<vmem>>, vector<1x8x128xf32>
    %199 = vector.shape_cast %198 : vector<1x8x128xf32> to vector<8x128xf32>
    %cst_89 = arith.constant dense<0.000000e+00> : vector<8x128xf32>
    %200 = tpu.matmul %166, %12, %cst_89 {dimension_numbers = #tpu.dot_dimension_numbers<[1], [0], [0], [1], [0, 0, 1, 1], [], []>} : vector<8x32xf32>, vector<32x128xf32>, vector<8x128xf32> -> vector<8x128xf32>
    %201 = arith.addf %199, %200 : vector<8x128xf32>
    %202 = math.tanh %201 : vector<8x128xf32>
    %203 = vector.extract_strided_slice %202 {offsets = [0, 0], sizes = [8, 32], strides = [1, 1]} : vector<8x128xf32> to vector<8x32xf32>
    %cst_90 = arith.constant 5.000000e-01 : f32
    %204 = vector.broadcast %cst_90 : f32 to vector<8x32xf32>
    %205 = arith.mulf %204, %203 : vector<8x32xf32>
    %cst_91 = arith.constant 5.000000e-01 : f32
    %206 = vector.broadcast %cst_91 : f32 to vector<8x32xf32>
    %207 = arith.addf %205, %206 : vector<8x32xf32>
    %208 = vector.extract_strided_slice %202 {offsets = [0, 32], sizes = [8, 32], strides = [1, 1]} : vector<8x128xf32> to vector<8x32xf32>
    %cst_92 = arith.constant 5.000000e-01 : f32
    %209 = vector.broadcast %cst_92 : f32 to vector<8x32xf32>
    %210 = arith.mulf %209, %208 : vector<8x32xf32>
    %cst_93 = arith.constant 5.000000e-01 : f32
    %211 = vector.broadcast %cst_93 : f32 to vector<8x32xf32>
    %212 = arith.addf %210, %211 : vector<8x32xf32>
    %213 = vector.extract_strided_slice %202 {offsets = [0, 64], sizes = [8, 32], strides = [1, 1]} : vector<8x128xf32> to vector<8x32xf32>
    %cst_94 = arith.constant 5.000000e-01 : f32
    %214 = vector.broadcast %cst_94 : f32 to vector<8x32xf32>
    %215 = arith.mulf %214, %213 : vector<8x32xf32>
    %cst_95 = arith.constant 5.000000e-01 : f32
    %216 = vector.broadcast %cst_95 : f32 to vector<8x32xf32>
    %217 = arith.addf %215, %216 : vector<8x32xf32>
    %218 = vector.extract_strided_slice %202 {offsets = [0, 96], sizes = [8, 32], strides = [1, 1]} : vector<8x128xf32> to vector<8x32xf32>
    %219 = arith.mulf %212, %164 : vector<8x32xf32>
    %220 = arith.mulf %207, %218 : vector<8x32xf32>
    %221 = arith.addf %219, %220 : vector<8x32xf32>
    %222 = math.tanh %221 : vector<8x32xf32>
    %223 = arith.mulf %217, %222 : vector<8x32xf32>
    %cst_96 = arith.constant dense<0.000000e+00> : vector<8x128xf32>
    %224 = tpu.matmul %223, %13, %cst_96 {dimension_numbers = #tpu.dot_dimension_numbers<[1], [0], [0], [1], [0, 0, 1, 1], [], []>} : vector<8x32xf32>, vector<32x128xf32>, vector<8x128xf32> -> vector<8x128xf32>
    %cst_97 = arith.constant dense<0.000000e+00> : vector<8x128xf32>
    %225 = tpu.matmul %192, %14, %cst_97 {dimension_numbers = #tpu.dot_dimension_numbers<[1], [0], [0], [1], [0, 0, 1, 1], [], []>} : vector<8x32xf32>, vector<32x128xf32>, vector<8x128xf32> -> vector<8x128xf32>
    %226 = arith.addf %224, %225 : vector<8x128xf32>
    %227 = arith.addf %226, %17 : vector<8x128xf32>
    %228 = math.tanh %227 : vector<8x128xf32>
    %229 = vector.extract_strided_slice %228 {offsets = [0, 0], sizes = [8, 32], strides = [1, 1]} : vector<8x128xf32> to vector<8x32xf32>
    %cst_98 = arith.constant 5.000000e-01 : f32
    %230 = vector.broadcast %cst_98 : f32 to vector<8x32xf32>
    %231 = arith.mulf %230, %229 : vector<8x32xf32>
    %cst_99 = arith.constant 5.000000e-01 : f32
    %232 = vector.broadcast %cst_99 : f32 to vector<8x32xf32>
    %233 = arith.addf %231, %232 : vector<8x32xf32>
    %234 = vector.extract_strided_slice %228 {offsets = [0, 32], sizes = [8, 32], strides = [1, 1]} : vector<8x128xf32> to vector<8x32xf32>
    %cst_100 = arith.constant 5.000000e-01 : f32
    %235 = vector.broadcast %cst_100 : f32 to vector<8x32xf32>
    %236 = arith.mulf %235, %234 : vector<8x32xf32>
    %cst_101 = arith.constant 5.000000e-01 : f32
    %237 = vector.broadcast %cst_101 : f32 to vector<8x32xf32>
    %238 = arith.addf %236, %237 : vector<8x32xf32>
    %239 = vector.extract_strided_slice %228 {offsets = [0, 64], sizes = [8, 32], strides = [1, 1]} : vector<8x128xf32> to vector<8x32xf32>
    %cst_102 = arith.constant 5.000000e-01 : f32
    %240 = vector.broadcast %cst_102 : f32 to vector<8x32xf32>
    %241 = arith.mulf %240, %239 : vector<8x32xf32>
    %cst_103 = arith.constant 5.000000e-01 : f32
    %242 = vector.broadcast %cst_103 : f32 to vector<8x32xf32>
    %243 = arith.addf %241, %242 : vector<8x32xf32>
    %244 = vector.extract_strided_slice %228 {offsets = [0, 96], sizes = [8, 32], strides = [1, 1]} : vector<8x128xf32> to vector<8x32xf32>
    %245 = arith.mulf %238, %190 : vector<8x32xf32>
    %246 = arith.mulf %233, %244 : vector<8x32xf32>
    %247 = arith.addf %245, %246 : vector<8x32xf32>
    %248 = math.tanh %247 : vector<8x32xf32>
    %249 = arith.mulf %243, %248 : vector<8x32xf32>
    %250 = arith.index_cast %c3_i32 : i32 to index
    %c0_104 = arith.constant 0 : index
    %c0_105 = arith.constant 0 : index
    %251 = vector.load %arg11[%250, %c0_104, %c0_105] : memref<4x8x32xf32, #tpu.memory_space<vmem>>, vector<1x8x32xf32>
    %252 = vector.shape_cast %251 : vector<1x8x32xf32> to vector<8x32xf32>
    %253 = vector.shape_cast %249 : vector<8x32xf32> to vector<1x8x32xf32>
    tpu.vector_store %arg11[%250, %c0_104, %c0_105], %253 {strides = array<i32>} : memref<4x8x32xf32, #tpu.memory_space<vmem>>, vector<1x8x32xf32>,
    %c4_i32 = arith.constant 4 : i32
    %c0_106 = arith.constant 0 : index
    %c0_107 = arith.constant 0 : index
    %c0_108 = arith.constant 0 : index
    %254 = vector.load %arg15[%c0_106, %c0_107, %c0_108] : memref<2x8x32xf32, #tpu.memory_space<vmem>>, vector<1x8x32xf32>
    %255 = vector.shape_cast %254 : vector<1x8x32xf32> to vector<8x32xf32>
    %256 = vector.shape_cast %223 : vector<8x32xf32> to vector<1x8x32xf32>
    tpu.vector_store %arg15[%c0_106, %c0_107, %c0_108], %256 {strides = array<i32>} : memref<2x8x32xf32, #tpu.memory_space<vmem>>, vector<1x8x32xf32>,
    %c0_109 = arith.constant 0 : index
    %c0_110 = arith.constant 0 : index
    %c0_111 = arith.constant 0 : index
    %257 = vector.load %arg16[%c0_109, %c0_110, %c0_111] : memref<2x8x32xf32, #tpu.memory_space<vmem>>, vector<1x8x32xf32>
    %258 = vector.shape_cast %257 : vector<1x8x32xf32> to vector<8x32xf32>
    %259 = vector.shape_cast %221 : vector<8x32xf32> to vector<1x8x32xf32>
    tpu.vector_store %arg16[%c0_109, %c0_110, %c0_111], %259 {strides = array<i32>} : memref<2x8x32xf32, #tpu.memory_space<vmem>>, vector<1x8x32xf32>,
    %c1_112 = arith.constant 1 : index
    %c0_113 = arith.constant 0 : index
    %c0_114 = arith.constant 0 : index
    %260 = vector.load %arg15[%c1_112, %c0_113, %c0_114] : memref<2x8x32xf32, #tpu.memory_space<vmem>>, vector<1x8x32xf32>
    %261 = vector.shape_cast %260 : vector<1x8x32xf32> to vector<8x32xf32>
    %262 = vector.shape_cast %249 : vector<8x32xf32> to vector<1x8x32xf32>
    tpu.vector_store %arg15[%c1_112, %c0_113, %c0_114], %262 {strides = array<i32>} : memref<2x8x32xf32, #tpu.memory_space<vmem>>, vector<1x8x32xf32>,
    %c1_115 = arith.constant 1 : index
    %c0_116 = arith.constant 0 : index
    %c0_117 = arith.constant 0 : index
    %263 = vector.load %arg16[%c1_115, %c0_116, %c0_117] : memref<2x8x32xf32, #tpu.memory_space<vmem>>, vector<1x8x32xf32>
    %264 = vector.shape_cast %263 : vector<1x8x32xf32> to vector<8x32xf32>
    %265 = vector.shape_cast %247 : vector<8x32xf32> to vector<1x8x32xf32>
    tpu.vector_store %arg16[%c1_115, %c0_116, %c0_117], %265 {strides = array<i32>} : memref<2x8x32xf32, #tpu.memory_space<vmem>>, vector<1x8x32xf32>,
    %c1_i32_118 = arith.constant 1 : i32
    %266 = arith.cmpi eq, %arg1, %c1_i32_118 : i32
    %267 = arith.extui %266 : i1 to i32
    %c0_i32_119 = arith.constant 0 : i32
    %268 = arith.cmpi ne, %267, %c0_i32_119 : i32
    scf.if %268 {
      %c0_120 = arith.constant 0 : index
      %c0_121 = arith.constant 0 : index
      %c0_122 = arith.constant 0 : index
      %269 = vector.load %arg15[%c0_120, %c0_121, %c0_122] : memref<2x8x32xf32, #tpu.memory_space<vmem>>, vector<2x8x32xf32>
      %c0_123 = arith.constant 0 : index
      %c0_124 = arith.constant 0 : index
      %c0_125 = arith.constant 0 : index
      %270 = vector.load %arg12[%c0_123, %c0_124, %c0_125] : memref<2x8x32xf32, #tpu.memory_space<vmem>>, vector<2x8x32xf32>
      tpu.vector_store %arg12[%c0_123, %c0_124, %c0_125], %269 {strides = array<i32>} : memref<2x8x32xf32, #tpu.memory_space<vmem>>, vector<2x8x32xf32>,
      %c0_126 = arith.constant 0 : index
      %c0_127 = arith.constant 0 : index
      %c0_128 = arith.constant 0 : index
      %271 = vector.load %arg16[%c0_126, %c0_127, %c0_128] : memref<2x8x32xf32, #tpu.memory_space<vmem>>, vector<2x8x32xf32>
      %c0_129 = arith.constant 0 : index
      %c0_130 = arith.constant 0 : index
      %c0_131 = arith.constant 0 : index
      %272 = vector.load %arg13[%c0_129, %c0_130, %c0_131] : memref<2x8x32xf32, #tpu.memory_space<vmem>>, vector<2x8x32xf32>
      tpu.vector_store %arg13[%c0_129, %c0_130, %c0_131], %271 {strides = array<i32>} : memref<2x8x32xf32, #tpu.memory_space<vmem>>, vector<2x8x32xf32>,
    } else {
    }
    return
  }
  func.func @transform_0(%arg0: i32, %arg1: i32) -> (i32, i32, i32) {
    %c0_i32 = arith.constant 0 : i32
    %c0_i32_0 = arith.constant 0 : i32
    return %arg1, %arg0, %c0_i32 : i32, i32, i32
  }
  func.func @transform_1(%arg0: i32, %arg1: i32) -> (i32, i32) {
    %c0_i32 = arith.constant 0 : i32
    %c0_i32_0 = arith.constant 0 : i32
    %c0_i32_1 = arith.constant 0 : i32
    return %c0_i32, %c0_i32_0 : i32, i32
  }
  func.func @transform_2(%arg0: i32, %arg1: i32) -> (i32, i32) {
    %c0_i32 = arith.constant 0 : i32
    %c0_i32_0 = arith.constant 0 : i32
    %c0_i32_1 = arith.constant 0 : i32
    return %c0_i32, %c0_i32_0 : i32, i32
  }
  func.func @transform_3(%arg0: i32, %arg1: i32) -> (i32, i32, i32) {
    %c0_i32 = arith.constant 0 : i32
    %c0_i32_0 = arith.constant 0 : i32
    %c0_i32_1 = arith.constant 0 : i32
    return %c0_i32, %arg0, %c0_i32_0 : i32, i32, i32
  }
  func.func @transform_4(%arg0: i32, %arg1: i32) -> (i32, i32, i32) {
    %c0_i32 = arith.constant 0 : i32
    %c0_i32_0 = arith.constant 0 : i32
    %c0_i32_1 = arith.constant 0 : i32
    return %c0_i32, %arg0, %c0_i32_0 : i32, i32, i32
  }
  func.func @transform_5(%arg0: i32, %arg1: i32) -> (i32, i32) {
    %c0_i32 = arith.constant 0 : i32
    %c0_i32_0 = arith.constant 0 : i32
    %c0_i32_1 = arith.constant 0 : i32
    return %c0_i32, %c0_i32_0 : i32, i32
  }
  func.func @transform_6(%arg0: i32, %arg1: i32) -> (i32, i32) {
    %c0_i32 = arith.constant 0 : i32
    %c0_i32_0 = arith.constant 0 : i32
    %c0_i32_1 = arith.constant 0 : i32
    return %c0_i32, %c0_i32_0 : i32, i32
  }
  func.func @transform_7(%arg0: i32, %arg1: i32) -> (i32, i32) {
    %c0_i32 = arith.constant 0 : i32
    %c0_i32_0 = arith.constant 0 : i32
    %c0_i32_1 = arith.constant 0 : i32
    return %c0_i32, %c0_i32_0 : i32, i32
  }
  func.func @transform_8(%arg0: i32, %arg1: i32) -> (i32, i32) {
    %c0_i32 = arith.constant 0 : i32
    %c0_i32_0 = arith.constant 0 : i32
    %c0_i32_1 = arith.constant 0 : i32
    return %c0_i32, %c0_i32_0 : i32, i32
  }
  func.func @transform_9(%arg0: i32, %arg1: i32) -> (i32, i32, i32) {
    %c0_i32 = arith.constant 0 : i32
    %c0_i32_0 = arith.constant 0 : i32
    return %arg1, %arg0, %c0_i32 : i32, i32, i32
  }
  func.func @transform_10(%arg0: i32, %arg1: i32) -> (i32, i32, i32) {
    %c0_i32 = arith.constant 0 : i32
    %c0_i32_0 = arith.constant 0 : i32
    %c0_i32_1 = arith.constant 0 : i32
    return %c0_i32, %arg0, %c0_i32_0 : i32, i32, i32
  }
  func.func @transform_11(%arg0: i32, %arg1: i32) -> (i32, i32, i32) {
    %c0_i32 = arith.constant 0 : i32
    %c0_i32_0 = arith.constant 0 : i32
    %c0_i32_1 = arith.constant 0 : i32
    return %c0_i32, %arg0, %c0_i32_0 : i32, i32, i32
  }
}

</mosaic_0001>

<llo_original>
// kernel: tpu_custom_call.1
$region0: #{tpu_custom_call.1}
  #allocation0 [shape = 'u32[]', space=smem, size = 0x4, offset = 0x4, fixed_abs, tag = 'smem constant byte address 0x4 - core index']
  #allocation1 [shape = 'u32[144,128]{1,0:T(1,128)}', space=vmem, size = 0x12000, scoped, tag = 'internal scratch']
  #allocation2 [shape = 'f32[4,8,128]{2,1,0:T(8,128)}', space=vmem, size = 0x4000, scoped, tag = 'scratch operand']
  #allocation3 [shape = 'f32[2,8,32]{2,1,0:T(8,128)}', space=vmem, size = 0x2000, scoped, tag = 'scratch operand']
  #allocation4 [shape = 'f32[2,8,32]{2,1,0:T(8,128)}', space=vmem, size = 0x2000, scoped, tag = 'scratch operand']
  %s0 = inlined_call_operand.vmem [shape: f32[8,8,5], index: 0, kind: input, shape index: {}]
  %s1 = inlined_call_operand.hbm [shape: f32[5,128], index: 1, kind: input, shape index: {}]
  %s2 = inlined_call_operand.vmem [shape: f32[1,128], index: 2, kind: input, shape index: {}]
  %s3 = inlined_call_operand.vmem [shape: f32[2,8,32], index: 3, kind: input, shape index: {}]
  %s4 = inlined_call_operand.hbm [shape: f32[2,8,32], index: 4, kind: input, shape index: {}]
  %s5 = inlined_call_operand.vmem [shape: f32[32,128], index: 5, kind: input, shape index: {}]
  %s6 = inlined_call_operand.vmem [shape: f32[32,128], index: 6, kind: input, shape index: {}]
  %s7 = inlined_call_operand.vmem [shape: f32[32,128], index: 7, kind: input, shape index: {}]
  %s8 = inlined_call_operand.vmem [shape: f32[1,128], index: 8, kind: input, shape index: {}]
  %s9 = inlined_call_operand.hbm [shape: f32[8,8,32], index: 9, kind: output, shape index: {0}]
  %s10 = inlined_call_operand.hbm [shape: f32[2,8,32], index: 10, kind: output, shape index: {1}]
  %s11 = inlined_call_operand.hbm [shape: f32[2,8,32], index: 11, kind: output, shape index: {2}]
  %12 = xla_tuple %s9, %s10, %s11
  %s13 = sld [smem:[#allocation0]]
  $region101: #{tpu_custom_call.1} parent=0
    _
  %s15 = ssub.s32 1, %s13
  %s16 = scalar_select 0, %s15, %s13
  $region1: #{tpu_custom_call.1} parent=0
    #allocation5 [shape = 'u8[4096]{0}', space=vmem, size = 0x1000, scoped, tag = 'input window, operand 1, single buffered']
    #allocation6 [shape = 's32[2]{0}', space=sflag, size = 0x8, scoped, tag = 'scoped memory for tpu_custom_call.1']
    #allocation7 [shape = 's32[2]{0}', space=sflag, size = 0x8, scoped, tag = 'scoped memory for tpu_custom_call.1']
    #allocation8 [shape = 'u8[8192]{0}', space=vmem, size = 0x2000, scoped, tag = 'input window, operand 4, single buffered']
    #allocation9 [shape = 's32[1]{0}', space=sflag, size = 0x4, scoped, tag = 'scoped memory for tpu_custom_call.1']
    #allocation10 [shape = 'u8[32768]{0}', space=vmem, size = 0x8000, scoped, tag = 'output window, operand 0']
    #allocation11 [shape = 'u8[8192]{0}', space=vmem, size = 0x2000, scoped, tag = 'output window, operand 1, single buffered']
    #allocation12 [shape = 's32[1]{0}', space=sflag, size = 0x4, scoped, tag = 'scoped memory for tpu_custom_call.1']
    #allocation13 [shape = 'u8[8192]{0}', space=vmem, size = 0x2000, scoped, tag = 'output window, operand 2, single buffered']
    %17 = vsyncpa [#allocation6], 0
    %18 = vsyncpa [#allocation9], 0
    %19 = vsyncpa [#allocation7], 0
    %s20 = scalar_lea.sflag [#allocation7], 1
    %21 = vsyncpa %s20, 0
    %22 = vsyncpa [#allocation12], 0
    loop: start=0, step=1, limit=4
    $region2: #{tpu_custom_call.1} parent=1 // loop_pre_header
      _
    $region3: #{tpu_custom_call.1} parent=1 // loop_header
      %s24 = sphi 0, %s28
      %p25 = scmp.ge.s32.totalorder %s24, 4
      %s31 = sphi 0, %s43
      %s32 = sphi 0, %s39
      %s33 = sphi 0, %s31
      %s34 = sphi 0, %s32
      %s35 = sphi 0, %s33
      %s36 = sphi 0, %s34
      %s48 = sphi 0, %s50
      %s51 = sphi 0, %s48
      %s52 = sphi 0, %s51
      %s68 = sphi 0, %s52
      %s72 = sphi 0, %s72
      %s74 = sphi 0, %s72
      %s75 = sphi 0, %s74
      %s89 = sphi 0, %s75
      %s93 = sphi 0, %s93
      %s95 = sphi 0, %s93
      %s96 = sphi 0, %s95
      %s110 = sphi 0, %s96
      %s116 = sphi 0, %s118
      %s119 = sphi 0, %s116
      %s120 = sphi 0, %s119
      %s136 = sphi 0, %s120
      %s142 = sphi 0, %s144
      %s145 = sphi 0, %s142
      %s146 = sphi 0, %s145
      %s162 = sphi 0, %s146
      %s166 = sphi 0, %s166
      %s168 = sphi 0, %s166
      %s169 = sphi 0, %s168
      %s183 = sphi 0, %s169
      %s187 = sphi 0, %s187
      %s189 = sphi 0, %s187
      %s190 = sphi 0, %s189
      %s204 = sphi 0, %s190
      %s208 = sphi 0, %s208
      %s210 = sphi 0, %s208
      %s211 = sphi 0, %s210
      %s225 = sphi 0, %s211
      %s229 = sphi 0, %s229
      %s231 = sphi 0, %s229
      %s232 = sphi 0, %s231
      %s246 = sphi 0, %s232
      %s254 = sphi 0, %s256
      %s257 = sphi 0, %s254
      %s258 = sphi 0, %s257
      %s274 = sphi 0, %s258
      %s280 = sphi 0, %s282
      %s283 = sphi 0, %s280
      %s284 = sphi 0, %s283
      %s300 = sphi 0, %s284
      %s306 = sphi 0, %s308
      %s309 = sphi 0, %s306
      %s310 = sphi 0, %s309
      %s326 = sphi 0, %s310
    $region4: #{tpu_custom_call.1} parent=1 // loop_header_branch
      %27 = sbr.rel (%p25) target = $region8
    $region5: #{tpu_custom_call.1} parent=1 // loop_body
      %s29 = ssub.s32 %s24, 1
      %s30 = ssub.s32 %s24, 2
      %s37 = sadd.s32 1, %s32
      %p38 = scmp.ge.s32.totalorder %s37, 2
      %s39 = scalar_select %p38, 0, %s37
      %s40 = sadd.s32 1, %s31
      %s41 = scalar_select %p38, %s40, %s31
      %p42 = scmp.ge.s32.totalorder %s41, 1
      %s43 = scalar_select %p42, 0, %s41
      %s44 = ssub.s32 %s32, %s39
      %s45 = ssub.s32 %s31, %s43
      %s46 = sor.u32 %s44, %s45
      %p47 = scmp.eq.s32.totalorder %s46, 0
      %s49 = sadd.s32 %s48, 1
      %s50 = scalar_select %p47, %s48, %s49
      %p53 = pneg %p47
      %p54 = scmp.eq.s32.totalorder %s24, 1
      %p55 = por %p53, %p54
      %p56 = scmp.ne.s32.totalorder %s48, %s51
      %p57 = scmp.eq.s32.totalorder %s24, 0
      %p58 = por %p56, %p57
      %p59 = scmp.ne.s32.totalorder %s48, %s51
      %p60 = scmp.eq.s32.totalorder %s29, 1
      %p61 = por %p59, %p60
      %p62 = scmp.ne.s32.totalorder %s51, %s52
      %p63 = scmp.eq.s32.totalorder %s29, 0
      %p64 = por %p62, %p63
      %p65 = scmp.ne.s32.totalorder %s51, %s52
      %p66 = scmp.eq.s32.totalorder %s30, 1
      %p67 = por %p65, %p66
      %p69 = scmp.ne.s32.totalorder %s52, %s68
      %p70 = scmp.eq.s32.totalorder %s30, 0
      %p71 = por %p69, %p70
      %s73 = sadd.s32 %s72, 1
      %p76 = scmp.eq.s32.totalorder %s24, 1
      %p77 = scmp.ne.s32.totalorder %s72, %s74
      %p78 = scmp.eq.s32.totalorder %s24, 0
      %p79 = por %p77, %p78
      %p80 = scmp.ne.s32.totalorder %s72, %s74
      %p81 = scmp.eq.s32.totalorder %s29, 1
      %p82 = por %p80, %p81
      %p83 = scmp.ne.s32.totalorder %s74, %s75
      %p84 = scmp.eq.s32.totalorder %s29, 0
      %p85 = por %p83, %p84
      %p86 = scmp.ne.s32.totalorder %s74, %s75
      %p87 = scmp.eq.s32.totalorder %s30, 1
      %p88 = por %p86, %p87
      %p90 = scmp.ne.s32.totalorder %s75, %s89
      %p91 = scmp.eq.s32.totalorder %s30, 0
      %p92 = por %p90, %p91
      %s94 = sadd.s32 %s93, 1
      %p97 = scmp.eq.s32.totalorder %s24, 1
      %p98 = scmp.ne.s32.totalorder %s93, %s95
      %p99 = scmp.eq.s32.totalorder %s24, 0
      %p100 = por %p98, %p99
      %p101 = scmp.ne.s32.totalorder %s93, %s95
      %p102 = scmp.eq.s32.totalorder %s29, 1
      %p103 = por %p101, %p102
      %p104 = scmp.ne.s32.totalorder %s95, %s96
      %p105 = scmp.eq.s32.totalorder %s29, 0
      %p106 = por %p104, %p105
      %p107 = scmp.ne.s32.totalorder %s95, %s96
      %p108 = scmp.eq.s32.totalorder %s30, 1
      %p109 = por %p107, %p108
      %p111 = scmp.ne.s32.totalorder %s96, %s110
      %p112 = scmp.eq.s32.totalorder %s30, 0
      %p113 = por %p111, %p112
      %s114 = ssub.s32 %s31, %s43
      %p115 = scmp.eq.s32.totalorder %s114, 0
      %s117 = sadd.s32 %s116, 1
      %s118 = scalar_select %p115, %s116, %s117
      %p121 = pneg %p115
      %p122 = scmp.eq.s32.totalorder %s24, 1
      %p123 = por %p121, %p122
      %p124 = scmp.ne.s32.totalorder %s116, %s119
      %p125 = scmp.eq.s32.totalorder %s24, 0
      %p126 = por %p124, %p125
      %p127 = scmp.ne.s32.totalorder %s116, %s119
      %p128 = scmp.eq.s32.totalorder %s29, 1
      %p129 = por %p127, %p128
      %p130 = scmp.ne.s32.totalorder %s119, %s120
      %p131 = scmp.eq.s32.totalorder %s29, 0
      %p132 = por %p130, %p131
      %p133 = scmp.ne.s32.totalorder %s119, %s120
      %p134 = scmp.eq.s32.totalorder %s30, 1
      %p135 = por %p133, %p134
      %p137 = scmp.ne.s32.totalorder %s120, %s136
      %p138 = scmp.eq.s32.totalorder %s30, 0
      %p139 = por %p137, %p138
      %s140 = ssub.s32 %s31, %s43
      %p141 = scmp.eq.s32.totalorder %s140, 0
      %s143 = sadd.s32 %s142, 1
      %s144 = scalar_select %p141, %s142, %s143
      %p147 = pneg %p141
      %p148 = scmp.eq.s32.totalorder %s24, 1
      %p149 = por %p147, %p148
      %p150 = scmp.ne.s32.totalorder %s142, %s145
      %p151 = scmp.eq.s32.totalorder %s24, 0
      %p152 = por %p150, %p151
      %p153 = scmp.ne.s32.totalorder %s142, %s145
      %p154 = scmp.eq.s32.totalorder %s29, 1
      %p155 = por %p153, %p154
      %p156 = scmp.ne.s32.totalorder %s145, %s146
      %p157 = scmp.eq.s32.totalorder %s29, 0
      %p158 = por %p156, %p157
      %p159 = scmp.ne.s32.totalorder %s145, %s146
      %p160 = scmp.eq.s32.totalorder %s30, 1
      %p161 = por %p159, %p160
      %p163 = scmp.ne.s32.totalorder %s146, %s162
      %p164 = scmp.eq.s32.totalorder %s30, 0
      %p165 = por %p163, %p164
      %s167 = sadd.s32 %s166, 1
      %p170 = scmp.eq.s32.totalorder %s24, 1
      %p171 = scmp.ne.s32.totalorder %s166, %s168
      %p172 = scmp.eq.s32.totalorder %s24, 0
      %p173 = por %p171, %p172
      %p174 = scmp.ne.s32.totalorder %s166, %s168
      %p175 = scmp.eq.s32.totalorder %s29, 1
      %p176 = por %p174, %p175
      %p177 = scmp.ne.s32.totalorder %s168, %s169
      %p178 = scmp.eq.s32.totalorder %s29, 0
      %p179 = por %p177, %p178
      %p180 = scmp.ne.s32.totalorder %s168, %s169
      %p181 = scmp.eq.s32.totalorder %s30, 1
      %p182 = por %p180, %p181
      %p184 = scmp.ne.s32.totalorder %s169, %s183
      %p185 = scmp.eq.s32.totalorder %s30, 0
      %p186 = por %p184, %p185
      %s188 = sadd.s32 %s187, 1
      %p191 = scmp.eq.s32.totalorder %s24, 1
      %p192 = scmp.ne.s32.totalorder %s187, %s189
      %p193 = scmp.eq.s32.totalorder %s24, 0
      %p194 = por %p192, %p193
      %p195 = scmp.ne.s32.totalorder %s187, %s189
      %p196 = scmp.eq.s32.totalorder %s29, 1
      %p197 = por %p195, %p196
      %p198 = scmp.ne.s32.totalorder %s189, %s190
      %p199 = scmp.eq.s32.totalorder %s29, 0
      %p200 = por %p198, %p199
      %p201 = scmp.ne.s32.totalorder %s189, %s190
      %p202 = scmp.eq.s32.totalorder %s30, 1
      %p203 = por %p201, %p202
      %p205 = scmp.ne.s32.totalorder %s190, %s204
      %p206 = scmp.eq.s32.totalorder %s30, 0
      %p207 = por %p205, %p206
      %s209 = sadd.s32 %s208, 1
      %p212 = scmp.eq.s32.totalorder %s24, 1
      %p213 = scmp.ne.s32.totalorder %s208, %s210
      %p214 = scmp.eq.s32.totalorder %s24, 0
      %p215 = por %p213, %p214
      %p216 = scmp.ne.s32.totalorder %s208, %s210
      %p217 = scmp.eq.s32.totalorder %s29, 1
      %p218 = por %p216, %p217
      %p219 = scmp.ne.s32.totalorder %s210, %s211
      %p220 = scmp.eq.s32.totalorder %s29, 0
      %p221 = por %p219, %p220
      %p222 = scmp.ne.s32.totalorder %s210, %s211
      %p223 = scmp.eq.s32.totalorder %s30, 1
      %p224 = por %p222, %p223
      %p226 = scmp.ne.s32.totalorder %s211, %s225
      %p227 = scmp.eq.s32.totalorder %s30, 0
      %p228 = por %p226, %p227
      %s230 = sadd.s32 %s229, 1
      %p233 = scmp.eq.s32.totalorder %s24, 1
      %p234 = scmp.ne.s32.totalorder %s229, %s231
      %p235 = scmp.eq.s32.totalorder %s24, 0
      %p236 = por %p234, %p235
      %p237 = scmp.ne.s32.totalorder %s229, %s231
      %p238 = scmp.eq.s32.totalorder %s29, 1
      %p239 = por %p237, %p238
      %p240 = scmp.ne.s32.totalorder %s231, %s232
      %p241 = scmp.eq.s32.totalorder %s29, 0
      %p242 = por %p240, %p241
      %p243 = scmp.ne.s32.totalorder %s231, %s232
      %p244 = scmp.eq.s32.totalorder %s30, 1
      %p245 = por %p243, %p244
      %p247 = scmp.ne.s32.totalorder %s232, %s246
      %p248 = scmp.eq.s32.totalorder %s30, 0
      %p249 = por %p247, %p248
      %s250 = ssub.s32 %s32, %s39
      %s251 = ssub.s32 %s31, %s43
      %s252 = sor.u32 %s250, %s251
      %p253 = scmp.eq.s32.totalorder %s252, 0
      %s255 = sadd.s32 %s254, 1
      %s256 = scalar_select %p253, %s254, %s255
      %p259 = pneg %p253
      %p260 = scmp.eq.s32.totalorder %s24, 1
      %p261 = por %p259, %p260
      %p262 = scmp.ne.s32.totalorder %s254, %s257
      %p263 = scmp.eq.s32.totalorder %s24, 0
      %p264 = por %p262, %p263
      %p265 = scmp.ne.s32.totalorder %s254, %s257
      %p266 = scmp.eq.s32.totalorder %s29, 1
      %p267 = por %p265, %p266
      %p268 = scmp.ne.s32.totalorder %s257, %s258
      %p269 = scmp.eq.s32.totalorder %s29, 0
      %p270 = por %p268, %p269
      %p271 = scmp.ne.s32.totalorder %s257, %s258
      %p272 = scmp.eq.s32.totalorder %s30, 1
      %p273 = por %p271, %p272
      %p275 = scmp.ne.s32.totalorder %s258, %s274
      %p276 = scmp.eq.s32.totalorder %s30, 0
      %p277 = por %p275, %p276
      %s278 = ssub.s32 %s31, %s43
      %p279 = scmp.eq.s32.totalorder %s278, 0
      %s281 = sadd.s32 %s280, 1
      %s282 = scalar_select %p279, %s280, %s281
      %p285 = pneg %p279
      %p286 = scmp.eq.s32.totalorder %s24, 1
      %p287 = por %p285, %p286
      %p288 = scmp.ne.s32.totalorder %s280, %s283
      %p289 = scmp.eq.s32.totalorder %s24, 0
      %p290 = por %p288, %p289
      %p291 = scmp.ne.s32.totalorder %s280, %s283
      %p292 = scmp.eq.s32.totalorder %s29, 1
      %p293 = por %p291, %p292
      %p294 = scmp.ne.s32.totalorder %s283, %s284
      %p295 = scmp.eq.s32.totalorder %s29, 0
      %p296 = por %p294, %p295
      %p297 = scmp.ne.s32.totalorder %s283, %s284
      %p298 = scmp.eq.s32.totalorder %s30, 1
      %p299 = por %p297, %p298
      %p301 = scmp.ne.s32.totalorder %s284, %s300
      %p302 = scmp.eq.s32.totalorder %s30, 0
      %p303 = por %p301, %p302
      %s304 = ssub.s32 %s31, %s43
      %p305 = scmp.eq.s32.totalorder %s304, 0
      %s307 = sadd.s32 %s306, 1
      %s308 = scalar_select %p305, %s306, %s307
      %p311 = pneg %p305
      %p312 = scmp.eq.s32.totalorder %s24, 1
      %p313 = por %p311, %p312
      %p314 = scmp.ne.s32.totalorder %s306, %s309
      %p315 = scmp.eq.s32.totalorder %s24, 0
      %p316 = por %p314, %p315
      %p317 = scmp.ne.s32.totalorder %s306, %s309
      %p318 = scmp.eq.s32.totalorder %s29, 1
      %p319 = por %p317, %p318
      %p320 = scmp.ne.s32.totalorder %s309, %s310
      %p321 = scmp.eq.s32.totalorder %s29, 0
      %p322 = por %p320, %p321
      %p323 = scmp.ne.s32.totalorder %s309, %s310
      %p324 = scmp.eq.s32.totalorder %s30, 1
      %p325 = por %p323, %p324
      %p327 = scmp.ne.s32.totalorder %s310, %s326
      %p328 = scmp.eq.s32.totalorder %s30, 0
      %p329 = por %p327, %p328
      %p330 = scmp.le.s32.totalorder 1, %s24
      %p331 = scmp.lt.s32.totalorder %s24, 3
      %p332 = pnand %p330, %p331
      %p333 = pneg %p332
      // Predicated region
      $region9: #{tpu_custom_call.1} parent=5 // pred_check
        _
      $region10: #{tpu_custom_call.1} parent=5 // pred_check_branch
        %335 = sbr.rel (%p332) target = $region12
      $region11: #{tpu_custom_call.1} parent=5 // pred_region
        %s336 = ssub.s32 %s24, 1
        // Predicated region
        $region13: #{tpu_custom_call.1} parent=11 // pred_check
          %p337 = pneg %p85
        $region14: #{tpu_custom_call.1} parent=11 // pred_check_branch
          %339 = sbr.rel (%p337) target = $region16
        $region15: #{tpu_custom_call.1} parent=11 // pred_region
          %s341 = ssub.s32 128, 128
          %342 = vsyncadd [#allocation6], %s341
          %s344 = sshll.u32 [#allocation5], 4
          %s345 = int_to_ptr.vmem [resolvable:$true] %s344
          %347 = dma.hbm_to_vmem [thread:$0]  %s1, 128, %s345, [#allocation6]
        $region16: #{tpu_custom_call.1} parent=11 // pred_fallthru
          _
        // Predicated region
        $region17: #{tpu_custom_call.1} parent=11 // pred_check
          %p348 = pneg %p106
        $region18: #{tpu_custom_call.1} parent=11 // pred_check_branch
          %350 = sbr.rel (%p348) target = $region20
        $region19: #{tpu_custom_call.1} parent=11 // pred_region
          _
        $region20: #{tpu_custom_call.1} parent=11 // pred_fallthru
          _
        // Predicated region
        $region21: #{tpu_custom_call.1} parent=11 // pred_check
          %p351 = pneg %p132
        $region22: #{tpu_custom_call.1} parent=11 // pred_check_branch
          %353 = sbr.rel (%p351) target = $region24
        $region23: #{tpu_custom_call.1} parent=11 // pred_region
          %p354 = scmp.lt.s32.totalorder %s33, 0
          %s355 = scalar_select %p354, %s33, 0
          %s356 = smul.addr %s355, 8
          %s357 = scalar_lea.vmem %s3, %s356
        $region24: #{tpu_custom_call.1} parent=11 // pred_fallthru
          _
        // Predicated region
        $region25: #{tpu_custom_call.1} parent=11 // pred_check
          %p358 = pneg %p158
        $region26: #{tpu_custom_call.1} parent=11 // pred_check_branch
          %360 = sbr.rel (%p358) target = $region28
        $region27: #{tpu_custom_call.1} parent=11 // pred_region
          %s362 = ssub.s32 256, 256
          %363 = vsyncadd [#allocation9], %s362
          %s364 = smul.addr %s33, 128
          %s365 = scalar_lea.hbm %s4, %s364
          %s366 = sshll.u32 [#allocation8], 4
          %s367 = int_to_ptr.vmem [resolvable:$true] %s366
          %372 = dma.hbm_to_vmem [thread:$0]  %s365, 256, %s367, [#allocation9], 128, 128, 8
        $region28: #{tpu_custom_call.1} parent=11 // pred_fallthru
          _
        // Predicated region
        $region29: #{tpu_custom_call.1} parent=11 // pred_check
          %p373 = pneg %p179
        $region30: #{tpu_custom_call.1} parent=11 // pred_check_branch
          %375 = sbr.rel (%p373) target = $region32
        $region31: #{tpu_custom_call.1} parent=11 // pred_region
          _
        $region32: #{tpu_custom_call.1} parent=11 // pred_fallthru
          _
        // Predicated region
        $region33: #{tpu_custom_call.1} parent=11 // pred_check
          %p376 = pneg %p200
        $region34: #{tpu_custom_call.1} parent=11 // pred_check_branch
          %378 = sbr.rel (%p376) target = $region36
        $region35: #{tpu_custom_call.1} parent=11 // pred_region
          _
        $region36: #{tpu_custom_call.1} parent=11 // pred_fallthru
          _
        // Predicated region
        $region37: #{tpu_custom_call.1} parent=11 // pred_check
          %p379 = pneg %p221
        $region38: #{tpu_custom_call.1} parent=11 // pred_check_branch
          %381 = sbr.rel (%p379) target = $region40
        $region39: #{tpu_custom_call.1} parent=11 // pred_region
          _
        $region40: #{tpu_custom_call.1} parent=11 // pred_fallthru
          _
        // Predicated region
        $region41: #{tpu_custom_call.1} parent=11 // pred_check
          %p382 = pneg %p242
        $region42: #{tpu_custom_call.1} parent=11 // pred_check_branch
          %384 = sbr.rel (%p382) target = $region44
        $region43: #{tpu_custom_call.1} parent=11 // pred_region
          _
        $region44: #{tpu_custom_call.1} parent=11 // pred_fallthru
          _
      $region12: #{tpu_custom_call.1} parent=5 // pred_fallthru
        _
      %p385 = scmp.lt.s32.totalorder %s24, 2
      // Predicated region
      $region45: #{tpu_custom_call.1} parent=5 // pred_check
        %p386 = pneg %p385
      $region46: #{tpu_custom_call.1} parent=5 // pred_check_branch
        %388 = sbr.rel (%p386) target = $region48
      $region47: #{tpu_custom_call.1} parent=5 // pred_region
        // Predicated region
        $region49: #{tpu_custom_call.1} parent=47 // pred_check
          %p389 = pneg %p58
        $region50: #{tpu_custom_call.1} parent=47 // pred_check_branch
          %391 = sbr.rel (%p389) target = $region52
        $region51: #{tpu_custom_call.1} parent=47 // pred_region
          %s392 = smul.u32 4, %s32
          %p393 = scmp.lt.s32.totalorder %s392, 7
          %s394 = scalar_select %p393, %s392, 7
          %p395 = scmp.lt.s32.totalorder %s31, 0
          %s396 = scalar_select %p395, %s31, 0
          %s397 = sadd.s32 %s396, %s394
          %s398 = smul.addr %s397, 8
          %s399 = scalar_lea.vmem %s0, %s398
          %s400 = smul.u32 4, %s32
        $region52: #{tpu_custom_call.1} parent=47 // pred_fallthru
          _
      $region48: #{tpu_custom_call.1} parent=5 // pred_fallthru
        _
      %p401 = scmp.le.s32.totalorder 1, %s24
      %p402 = scmp.lt.s32.totalorder %s24, 3
      %p403 = pnand %p401, %p402
      %p404 = pneg %p403
      // Predicated region
      $region53: #{tpu_custom_call.1} parent=5 // pred_check
        _
      $region54: #{tpu_custom_call.1} parent=5 // pred_check_branch
        %406 = sbr.rel (%p403) target = $region56
      $region55: #{tpu_custom_call.1} parent=5 // pred_region
        %s407 = ssub.s32 %s24, 1
        // Predicated region
        $region57: #{tpu_custom_call.1} parent=55 // pred_check
          %p408 = pneg %p85
        $region58: #{tpu_custom_call.1} parent=55 // pred_check_branch
          %410 = sbr.rel (%p408) target = $region60
        $region59: #{tpu_custom_call.1} parent=55 // pred_region
          %411 = dma.done [#allocation6], 128
        $region60: #{tpu_custom_call.1} parent=55 // pred_fallthru
          _
        // Predicated region
        $region61: #{tpu_custom_call.1} parent=55 // pred_check
          %p412 = pneg %p158
        $region62: #{tpu_custom_call.1} parent=55 // pred_check_branch
          %414 = sbr.rel (%p412) target = $region64
        $region63: #{tpu_custom_call.1} parent=55 // pred_region
          %415 = dma.done [#allocation9], 256
        $region64: #{tpu_custom_call.1} parent=55 // pred_fallthru
          _
        %s416 = smul.u32 4, %s34
        %p417 = scmp.lt.s32.totalorder %s416, 7
        %s418 = scalar_select %p417, %s416, 7
        %p419 = scmp.lt.s32.totalorder %s33, 0
        %s420 = scalar_select %p419, %s33, 0
        %s421 = sadd.s32 %s420, %s418
        %s422 = smul.addr %s421, 8
        %s423 = scalar_lea.vmem %s0, %s422
        %p424 = pneg %p64
        %p425 = pneg %p61
        %p426 = pneg %p85
        %p427 = pneg %p82
        %p428 = pneg %p106
        %p429 = pneg %p103
        %p430 = scmp.lt.s32.totalorder %s33, 0
        %s431 = scalar_select %p430, %s33, 0
        %s432 = smul.addr %s431, 8
        %s433 = scalar_lea.vmem %s3, %s432
        %p434 = pneg %p132
        %p435 = pneg %p129
        %p436 = pneg %p158
        %p437 = pneg %p155
        %p438 = pneg %p179
        %p439 = pneg %p176
        %p440 = pneg %p200
        %p441 = pneg %p197
        %p442 = pneg %p221
        %p443 = pneg %p218
        %p444 = pneg %p242
        %p445 = pneg %p239
        %p446 = pneg %p270
        %p447 = pneg %p267
        %s448 = sand.u32 %s257, 1
        %s449 = scalar_lea.sflag [#allocation7], %s448
        %s450 = sand.u32 %s257, 1
        %s451 = smul.addr %s450, 32
        %s452 = scalar_lea.vmem [#allocation10], %s451
        %p453 = pneg %p296
        %p454 = pneg %p293
        %p455 = pneg %p322
        %p456 = pneg %p319
        %s457 = smul.u32 4, %s34
        %p458 = scmp.lt.s32.totalorder %s457, 7
        %s459 = scalar_select %p458, %s457, 7
        %p460 = scmp.lt.s32.totalorder %s33, 0
        %s461 = scalar_select %p460, %s33, 0
        %s462 = sadd.s32 %s461, %s459
        %s463 = smul.addr %s462, 8
        %s464 = scalar_lea.vmem %s0, %s463
        %s465 = smul.u32 4, %s34
        %p466 = scmp.lt.s32.totalorder %s33, 0
        %s467 = scalar_select %p466, %s33, 0
        %s468 = smul.addr %s467, 8
        %s469 = scalar_lea.vmem %s3, %s468
        %s470 = smul.u32 4, %s34
        %p471 = scmp.eq.s32.totalorder %s34, 0
        // Predicated region
        $region65: #{tpu_custom_call.1} parent=55 // pred_check
          %p472 = pneg %p471
        $region66: #{tpu_custom_call.1} parent=55 // pred_check_branch
          %474 = sbr.rel (%p472) target = $region68
        $region67: #{tpu_custom_call.1} parent=55 // pred_region
          %v475 = vld [vmem:[%s469] sm:$0xff]
          %v476 = vld [vmem:[%s469 + $0x8] sm:$0xff]
          %vm477 = vcmask 261120
          %478 = vst.msk [vmem:[#allocation3] sm:$0xff] %vm477, %v475
          %479 = vst.msk [vmem:[#allocation3 + $0x8] sm:$0xff] %vm477, %v476
          %v480 = vld [vmem:[#allocation8] sm:$0xff]
          %v481 = vld [vmem:[#allocation8 + $0x8] sm:$0xff]
          %482 = vst.msk [vmem:[#allocation4] sm:$0xff] %vm477, %v480
          %483 = vst.msk [vmem:[#allocation4 + $0x8] sm:$0xff] %vm477, %v481
        $region68: #{tpu_custom_call.1} parent=55 // pred_fallthru
          _
        %v484 = vld [vmem:[%s464] sm:$0xff]
        %v485 = vld [vmem:[%s464 + $0x8] sm:$0xff]
        %v486 = vld [vmem:[%s464 + $0x10] sm:$0xff]
        %v487 = vld [vmem:[%s464 + $0x18] sm:$0xff]
        %v488 = vld [vmem:[#allocation5] sm:$0x1f]
        %v489 = vld [vmem:[%s2] sm:$0x1]
        %v491 = vlaneseq
        %v492 = vshrl.u32 %v491, 7
        %v493 = vsub.s32 0, %v492
        %v494 = vrot.slane %v489, %v493
        %vm496 = vcmask 39936
        %v498 = vsel %vm496, %v484, 0
        %v501 = vsel %vm496, %v485, 0
        %v504 = vsel %vm496, %v486, 0
        %v507 = vsel %vm496, %v487, 0
        %vm509 = vcmask 1044480
        %v511 = vsel %vm509, %v488, 0
        %513 = vmatprep.subr.mxu0 0.0
        %514 = vmatpush1.msra.mxu0 %v511
        %515 = vmatprep.subr.mxu0 0.0
        %516 = vmatpush1.msra.mxu0 0.0
        %517 = vmatprep.subr.mxu0 0.0
        %518 = vmatpush1.msra.mxu0 0.0
        %519 = vmatprep.subr.mxu0 0.0
        %520 = vmatpush1.msra.mxu0 0.0
        %521 = vmatprep.subr.mxu0 0.0
        %522 = vmatpush1.msra.mxu0 0.0
        %523 = vmatprep.subr.mxu0 0.0
        %524 = vmatpush1.msra.mxu0 0.0
        %525 = vmatprep.subr.mxu0 0.0
        %526 = vmatpush1.msra.mxu0 0.0
        %527 = vmatprep.subr.mxu0 0.0
        %528 = vmatpush1.msra.mxu0 0.0
        %529 = vmatprep.subr.mxu0 0.0
        %530 = vmatpush1.msra.mxu0 0.0
        %531 = vmatprep.subr.mxu0 0.0
        %532 = vmatpush1.msra.mxu0 0.0
        %533 = vmatprep.subr.mxu0 0.0
        %534 = vmatpush1.msra.mxu0 0.0
        %535 = vmatprep.subr.mxu0 0.0
        %536 = vmatpush1.msra.mxu0 0.0
        %537 = vmatprep.subr.mxu0 0.0
        %538 = vmatpush1.msra.mxu0 0.0
        %539 = vmatprep.subr.mxu0 0.0
        %540 = vmatpush1.msra.mxu0 0.0
        %541 = vmatprep.subr.mxu0 0.0
        %542 = vmatpush1.msra.mxu0 0.0
        %543 = vmatprep.subr.mxu0 0.0
        %544 = vmatpush1.msra.mxu0 0.0
        %545 = vmatprep.subr.mxu0 0.0
        %546 = vmatpush1.msra.mxu0 0.0
        %547 = vmatprep.subr.mxu0 0.0
        %548 = vmatpush1.msra.mxu0 0.0
        %549 = vmatprep.subr.mxu0 0.0
        %550 = vmatpush1.msra.mxu0 0.0
        %551 = vmatprep.subr.mxu0 0.0
        %552 = vmatpush1.msra.mxu0 0.0
        %553 = vmatprep.subr.mxu0 0.0
        %554 = vmatpush1.msra.mxu0 0.0
        %555 = vmatprep.subr.mxu0 0.0
        %556 = vmatpush1.msra.mxu0 0.0
        %557 = vmatprep.subr.mxu0 0.0
        %558 = vmatpush1.msra.mxu0 0.0
        %559 = vmatprep.subr.mxu0 0.0
        %560 = vmatpush1.msra.mxu0 0.0
        %561 = vmatprep.subr.mxu0 0.0
        %562 = vmatpush1.msra.mxu0 0.0
        %563 = vmatprep.subr.mxu0 0.0
        %564 = vmatpush1.msra.mxu0 0.0
        %565 = vmatprep.subr.mxu0 0.0
        %566 = vmatpush1.msra.mxu0 0.0
        %567 = vmatprep.subr.mxu0 0.0
        %568 = vmatpush1.msra.mxu0 0.0
        %569 = vmatprep.subr.mxu0 0.0
        %570 = vmatpush1.msra.mxu0 0.0
        %571 = vmatprep.subr.mxu0 0.0
        %572 = vmatpush1.msra.mxu0 0.0
        %573 = vmatprep.subr.mxu0 0.0
        %574 = vmatpush1.msra.mxu0 0.0
        %575 = vmatprep.subr.mxu0 0.0
        %576 = vmatpush1.msra.mxu0 0.0
        %577 = vmatprep.mubr.f32.mxu0 0.0
        %578 = vmatmul.mubr.f32.gmra.mrb[0].mxu0 %v498
        %v579 = vpop.f32.mrb[0].mxu0
        %v580 = vadd.f32 %v494, %v579
        %v581 = vpop.f32.mrb[0].mxu0
        %582 = vmatprep.mubr.f32.mxu0 0.0
        %583 = vmatmul.mubr.f32.gmra.mrb[0].mxu0 %v501
        %v584 = vpop.f32.mrb[0].mxu0
        %v585 = vadd.f32 %v494, %v584
        %v586 = vpop.f32.mrb[0].mxu0
        %587 = vmatprep.mubr.f32.mxu0 0.0
        %588 = vmatmul.mubr.f32.gmra.mrb[0].mxu0 %v504
        %v589 = vpop.f32.mrb[0].mxu0
        %v590 = vadd.f32 %v494, %v589
        %v591 = vpop.f32.mrb[0].mxu0
        %592 = vmatprep.mubr.f32.mxu0 0.0
        %593 = vmatmul.mubr.f32.gmra.mrb[0].mxu0 %v507
        %v594 = vpop.f32.mrb[0].mxu0
        %v595 = vadd.f32 %v494, %v594
        %v596 = vpop.f32.mrb[0].mxu0
        %597 = vdwg.mxu0
        %598 = vst [vmem:[#allocation2] sm:$0xff] %v580
        %599 = vst [vmem:[#allocation2 + $0x8] sm:$0xff] %v585
        %600 = vst [vmem:[#allocation2 + $0x10] sm:$0xff] %v590
        %601 = vst [vmem:[#allocation2 + $0x18] sm:$0xff] %v595
        %v602 = vld [vmem:[%s5] sm:$0xff]
        %v603 = vld [vmem:[%s5 + $0x8] sm:$0xff]
        %v604 = vld [vmem:[%s5 + $0x10] sm:$0xff]
        %v605 = vld [vmem:[%s5 + $0x18] sm:$0xff]
        %v606 = vld [vmem:[%s6] sm:$0xff]
        %v607 = vld [vmem:[%s6 + $0x8] sm:$0xff]
        %v608 = vld [vmem:[%s6 + $0x10] sm:$0xff]
        %v609 = vld [vmem:[%s6 + $0x18] sm:$0xff]
        %v610 = vld [vmem:[%s7] sm:$0xff]
        %v611 = vld [vmem:[%s7 + $0x8] sm:$0xff]
        %v612 = vld [vmem:[%s7 + $0x10] sm:$0xff]
        %v613 = vld [vmem:[%s7 + $0x18] sm:$0xff]
        %v614 = vld [vmem:[%s8] sm:$0x1]
        %v616 = vlaneseq
        %v617 = vshrl.u32 %v616, 7
        %v618 = vsub.s32 0, %v617
        %v619 = vrot.slane %v614, %v618
        %v621 = vld [vmem:[#allocation3] sm:$0xff]
        %s622 = scalar_lea.vmem [#allocation3], 8
        %v623 = vld [vmem:[%s622] sm:$0xff]
        %v624 = vld [vmem:[#allocation4] sm:$0xff]
        %s625 = scalar_lea.vmem [#allocation4], 8
        %v626 = vld [vmem:[%s625] sm:$0xff]
        %v627 = vld [vmem:[#allocation2] sm:$0xff]
        %vm628 = vcmask 261120
        %v630 = vsel %vm628, %v621, 0
        %632 = vmatprep.subr.mxu0 0.0
        %633 = vmatpush1.msra.mxu0 %v602
        %634 = vmatprep.subr.mxu0 0.0
        %635 = vmatpush1.msra.mxu0 %v603
        %636 = vmatprep.subr.mxu0 0.0
        %637 = vmatpush1.msra.mxu0 %v604
        %638 = vmatprep.subr.mxu0 0.0
        %639 = vmatpush1.msra.mxu0 %v605
        %640 = vmatprep.subr.mxu0 0.0
        %641 = vmatpush1.msra.mxu0 0.0
        %642 = vmatprep.subr.mxu0 0.0
        %643 = vmatpush1.msra.mxu0 0.0
        %644 = vmatprep.subr.mxu0 0.0
        %645 = vmatpush1.msra.mxu0 0.0
        %646 = vmatprep.subr.mxu0 0.0
        %647 = vmatpush1.msra.mxu0 0.0
        %648 = vmatprep.subr.mxu0 0.0
        %649 = vmatpush1.msra.mxu0 0.0
        %650 = vmatprep.subr.mxu0 0.0
        %651 = vmatpush1.msra.mxu0 0.0
        %652 = vmatprep.subr.mxu0 0.0
        %653 = vmatpush1.msra.mxu0 0.0
        %654 = vmatprep.subr.mxu0 0.0
        %655 = vmatpush1.msra.mxu0 0.0
        %656 = vmatprep.subr.mxu0 0.0
        %657 = vmatpush1.msra.mxu0 0.0
        %658 = vmatprep.subr.mxu0 0.0
        %659 = vmatpush1.msra.mxu0 0.0
        %660 = vmatprep.subr.mxu0 0.0
        %661 = vmatpush1.msra.mxu0 0.0
        %662 = vmatprep.subr.mxu0 0.0
        %663 = vmatpush1.msra.mxu0 0.0
        %664 = vmatprep.subr.mxu0 0.0
        %665 = vmatpush1.msra.mxu0 0.0
        %666 = vmatprep.subr.mxu0 0.0
        %667 = vmatpush1.msra.mxu0 0.0
        %668 = vmatprep.subr.mxu0 0.0
        %669 = vmatpush1.msra.mxu0 0.0
        %670 = vmatprep.subr.mxu0 0.0
        %671 = vmatpush1.msra.mxu0 0.0
        %672 = vmatprep.subr.mxu0 0.0
        %673 = vmatpush1.msra.mxu0 0.0
        %674 = vmatprep.subr.mxu0 0.0
        %675 = vmatpush1.msra.mxu0 0.0
        %676 = vmatprep.subr.mxu0 0.0
        %677 = vmatpush1.msra.mxu0 0.0
        %678 = vmatprep.subr.mxu0 0.0
        %679 = vmatpush1.msra.mxu0 0.0
        %680 = vmatprep.subr.mxu0 0.0
        %681 = vmatpush1.msra.mxu0 0.0
        %682 = vmatprep.subr.mxu0 0.0
        %683 = vmatpush1.msra.mxu0 0.0
        %684 = vmatprep.subr.mxu0 0.0
        %685 = vmatpush1.msra.mxu0 0.0
        %686 = vmatprep.subr.mxu0 0.0
        %687 = vmatpush1.msra.mxu0 0.0
        %688 = vmatprep.subr.mxu0 0.0
        %689 = vmatpush1.msra.mxu0 0.0
        %690 = vmatprep.subr.mxu0 0.0
        %691 = vmatpush1.msra.mxu0 0.0
        %692 = vmatprep.subr.mxu0 0.0
        %693 = vmatpush1.msra.mxu0 0.0
        %694 = vmatprep.subr.mxu0 0.0
        %695 = vmatpush1.msra.mxu0 0.0
        %696 = vmatprep.mubr.f32.mxu0 0.0
        %697 = vmatmul.mubr.f32.gmra.mrb[0].mxu0 %v630
        %v698 = vpop.f32.mrb[0].mxu0
        %v699 = vadd.f32 0.0, %v698
        %v700 = vpop.f32.mrb[0].mxu0
        %701 = vdwg.mxu0
        %v702 = vadd.f32 %v627, %v699
        %v703 = vtanh.pop %v702
        %v704 = vmul.f32 %v703, 0.5
        %v705 = vadd.f32 %v704, 0.5
        %707 = vrot.lane.b32.xlu0 %v624, 32
        %v708 = vpop.permute.xlu0 %707
        %v710 = vmul.f32 %v705, %v708
        %712 = vrot.lane.b32.xlu0 %v703, 32
        %v713 = vpop.permute.xlu0 %712
        %v715 = vmul.f32 %v705, %v713
        %717 = vrot.lane.b32.xlu0 %v715, 32
        %v718 = vpop.permute.xlu0 %717
        %v720 = vadd.f32 %v710, %v718
        %v721 = vtanh.pop %v720
        %723 = vrot.lane.b32.xlu0 %v721, 32
        %v724 = vpop.permute.xlu0 %723
        %v726 = vmul.f32 %v705, %v724
        %v728 = vsel %vm628, %v623, 0
        %730 = vmatprep.subr.mxu0 0.0
        %731 = vmatpush1.msra.mxu0 %v610
        %732 = vmatprep.subr.mxu0 0.0
        %733 = vmatpush1.msra.mxu0 %v611
        %734 = vmatprep.subr.mxu0 0.0
        %735 = vmatpush1.msra.mxu0 %v612
        %736 = vmatprep.subr.mxu0 0.0
        %737 = vmatpush1.msra.mxu0 %v613
        %738 = vmatprep.subr.mxu0 0.0
        %739 = vmatpush1.msra.mxu0 0.0
        %740 = vmatprep.subr.mxu0 0.0
        %741 = vmatpush1.msra.mxu0 0.0
        %742 = vmatprep.subr.mxu0 0.0
        %743 = vmatpush1.msra.mxu0 0.0
        %744 = vmatprep.subr.mxu0 0.0
        %745 = vmatpush1.msra.mxu0 0.0
        %746 = vmatprep.subr.mxu0 0.0
        %747 = vmatpush1.msra.mxu0 0.0
        %748 = vmatprep.subr.mxu0 0.0
        %749 = vmatpush1.msra.mxu0 0.0
        %750 = vmatprep.subr.mxu0 0.0
        %751 = vmatpush1.msra.mxu0 0.0
        %752 = vmatprep.subr.mxu0 0.0
        %753 = vmatpush1.msra.mxu0 0.0
        %754 = vmatprep.subr.mxu0 0.0
        %755 = vmatpush1.msra.mxu0 0.0
        %756 = vmatprep.subr.mxu0 0.0
        %757 = vmatpush1.msra.mxu0 0.0
        %758 = vmatprep.subr.mxu0 0.0
        %759 = vmatpush1.msra.mxu0 0.0
        %760 = vmatprep.subr.mxu0 0.0
        %761 = vmatpush1.msra.mxu0 0.0
        %762 = vmatprep.subr.mxu0 0.0
        %763 = vmatpush1.msra.mxu0 0.0
        %764 = vmatprep.subr.mxu0 0.0
        %765 = vmatpush1.msra.mxu0 0.0
        %766 = vmatprep.subr.mxu0 0.0
        %767 = vmatpush1.msra.mxu0 0.0
        %768 = vmatprep.subr.mxu0 0.0
        %769 = vmatpush1.msra.mxu0 0.0
        %770 = vmatprep.subr.mxu0 0.0
        %771 = vmatpush1.msra.mxu0 0.0
        %772 = vmatprep.subr.mxu0 0.0
        %773 = vmatpush1.msra.mxu0 0.0
        %774 = vmatprep.subr.mxu0 0.0
        %775 = vmatpush1.msra.mxu0 0.0
        %776 = vmatprep.subr.mxu0 0.0
        %777 = vmatpush1.msra.mxu0 0.0
        %778 = vmatprep.subr.mxu0 0.0
        %779 = vmatpush1.msra.mxu0 0.0
        %780 = vmatprep.subr.mxu0 0.0
        %781 = vmatpush1.msra.mxu0 0.0
        %782 = vmatprep.subr.mxu0 0.0
        %783 = vmatpush1.msra.mxu0 0.0
        %784 = vmatprep.subr.mxu0 0.0
        %785 = vmatpush1.msra.mxu0 0.0
        %786 = vmatprep.subr.mxu0 0.0
        %787 = vmatpush1.msra.mxu0 0.0
        %788 = vmatprep.subr.mxu0 0.0
        %789 = vmatpush1.msra.mxu0 0.0
        %790 = vmatprep.subr.mxu0 0.0
        %791 = vmatpush1.msra.mxu0 0.0
        %792 = vmatprep.subr.mxu0 0.0
        %793 = vmatpush1.msra.mxu0 0.0
        %794 = vmatprep.mubr.f32.mxu0 0.0
        %795 = vmatmul.mubr.f32.gmra.mrb[0].mxu0 %v728
        %v796 = vpop.f32.mrb[0].mxu0
        %v797 = vadd.f32 0.0, %v796
        %v798 = vpop.f32.mrb[0].mxu0
        %799 = vdwg.mxu0
        %801 = vrot.lane.b32.xlu0 %v726, 64
        %v802 = vpop.permute.xlu0 %801
        %v803 = vsel %vm628, %v802, 0
        %805 = vmatprep.subr.mxu0 0.0
        %806 = vmatpush1.msra.mxu0 %v606
        %807 = vmatprep.subr.mxu0 0.0
        %808 = vmatpush1.msra.mxu0 %v607
        %809 = vmatprep.subr.mxu0 0.0
        %810 = vmatpush1.msra.mxu0 %v608
        %811 = vmatprep.subr.mxu0 0.0
        %812 = vmatpush1.msra.mxu0 %v609
        %813 = vmatprep.subr.mxu0 0.0
        %814 = vmatpush1.msra.mxu0 0.0
        %815 = vmatprep.subr.mxu0 0.0
        %816 = vmatpush1.msra.mxu0 0.0
        %817 = vmatprep.subr.mxu0 0.0
        %818 = vmatpush1.msra.mxu0 0.0
        %819 = vmatprep.subr.mxu0 0.0
        %820 = vmatpush1.msra.mxu0 0.0
        %821 = vmatprep.subr.mxu0 0.0
        %822 = vmatpush1.msra.mxu0 0.0
        %823 = vmatprep.subr.mxu0 0.0
        %824 = vmatpush1.msra.mxu0 0.0
        %825 = vmatprep.subr.mxu0 0.0
        %826 = vmatpush1.msra.mxu0 0.0
        %827 = vmatprep.subr.mxu0 0.0
        %828 = vmatpush1.msra.mxu0 0.0
        %829 = vmatprep.subr.mxu0 0.0
        %830 = vmatpush1.msra.mxu0 0.0
        %831 = vmatprep.subr.mxu0 0.0
        %832 = vmatpush1.msra.mxu0 0.0
        %833 = vmatprep.subr.mxu0 0.0
        %834 = vmatpush1.msra.mxu0 0.0
        %835 = vmatprep.subr.mxu0 0.0
        %836 = vmatpush1.msra.mxu0 0.0
        %837 = vmatprep.subr.mxu0 0.0
        %838 = vmatpush1.msra.mxu0 0.0
        %839 = vmatprep.subr.mxu0 0.0
        %840 = vmatpush1.msra.mxu0 0.0
        %841 = vmatprep.subr.mxu0 0.0
        %842 = vmatpush1.msra.mxu0 0.0
        %843 = vmatprep.subr.mxu0 0.0
        %844 = vmatpush1.msra.mxu0 0.0
        %845 = vmatprep.subr.mxu0 0.0
        %846 = vmatpush1.msra.mxu0 0.0
        %847 = vmatprep.subr.mxu0 0.0
        %848 = vmatpush1.msra.mxu0 0.0
        %849 = vmatprep.subr.mxu0 0.0
        %850 = vmatpush1.msra.mxu0 0.0
        %851 = vmatprep.subr.mxu0 0.0
        %852 = vmatpush1.msra.mxu0 0.0
        %853 = vmatprep.subr.mxu0 0.0
        %854 = vmatpush1.msra.mxu0 0.0
        %855 = vmatprep.subr.mxu0 0.0
        %856 = vmatpush1.msra.mxu0 0.0
        %857 = vmatprep.subr.mxu0 0.0
        %858 = vmatpush1.msra.mxu0 0.0
        %859 = vmatprep.subr.mxu0 0.0
        %860 = vmatpush1.msra.mxu0 0.0
        %861 = vmatprep.subr.mxu0 0.0
        %862 = vmatpush1.msra.mxu0 0.0
        %863 = vmatprep.subr.mxu0 0.0
        %864 = vmatpush1.msra.mxu0 0.0
        %865 = vmatprep.subr.mxu0 0.0
        %866 = vmatpush1.msra.mxu0 0.0
        %867 = vmatprep.subr.mxu0 0.0
        %868 = vmatpush1.msra.mxu0 0.0
        %869 = vmatprep.mubr.f32.mxu0 0.0
        %870 = vmatmul.mubr.f32.gmra.mrb[0].mxu0 %v803
        %v871 = vpop.f32.mrb[0].mxu0
        %v872 = vadd.f32 %v797, %v871
        %v873 = vpop.f32.mrb[0].mxu0
        %874 = vdwg.mxu0
        %v875 = vadd.f32 %v872, %v619
        %v876 = vtanh.pop %v875
        %v877 = vmul.f32 %v876, 0.5
        %v878 = vadd.f32 %v877, 0.5
        %880 = vrot.lane.b32.xlu0 %v626, 32
        %v881 = vpop.permute.xlu0 %880
        %v883 = vmul.f32 %v878, %v881
        %885 = vrot.lane.b32.xlu0 %v876, 32
        %v886 = vpop.permute.xlu0 %885
        %v888 = vmul.f32 %v878, %v886
        %890 = vrot.lane.b32.xlu0 %v888, 32
        %v891 = vpop.permute.xlu0 %890
        %v893 = vadd.f32 %v883, %v891
        %v894 = vtanh.pop %v893
        %896 = vrot.lane.b32.xlu0 %v894, 32
        %v897 = vpop.permute.xlu0 %896
        %v899 = vmul.f32 %v878, %v897
        %901 = vrot.lane.b32.xlu0 %v899, 64
        %v902 = vpop.permute.xlu0 %901
        %904 = vst.msk [vmem:[%s452] sm:$0xff] %vm628, %v902
        %s905 = scalar_lea.vmem [#allocation2], 8
        %v906 = vld [vmem:[%s905] sm:$0xff]
        %907 = vmatprep.subr.mxu0 0.0
        %908 = vmatpush1.msra.mxu0 %v602
        %909 = vmatprep.subr.mxu0 0.0
        %910 = vmatpush1.msra.mxu0 %v603
        %911 = vmatprep.subr.mxu0 0.0
        %912 = vmatpush1.msra.mxu0 %v604
        %913 = vmatprep.subr.mxu0 0.0
        %914 = vmatpush1.msra.mxu0 %v605
        %915 = vmatprep.subr.mxu0 0.0
        %916 = vmatpush1.msra.mxu0 0.0
        %917 = vmatprep.subr.mxu0 0.0
        %918 = vmatpush1.msra.mxu0 0.0
        %919 = vmatprep.subr.mxu0 0.0
        %920 = vmatpush1.msra.mxu0 0.0
        %921 = vmatprep.subr.mxu0 0.0
        %922 = vmatpush1.msra.mxu0 0.0
        %923 = vmatprep.subr.mxu0 0.0
        %924 = vmatpush1.msra.mxu0 0.0
        %925 = vmatprep.subr.mxu0 0.0
        %926 = vmatpush1.msra.mxu0 0.0
        %927 = vmatprep.subr.mxu0 0.0
        %928 = vmatpush1.msra.mxu0 0.0
        %929 = vmatprep.subr.mxu0 0.0
        %930 = vmatpush1.msra.mxu0 0.0
        %931 = vmatprep.subr.mxu0 0.0
        %932 = vmatpush1.msra.mxu0 0.0
        %933 = vmatprep.subr.mxu0 0.0
        %934 = vmatpush1.msra.mxu0 0.0
        %935 = vmatprep.subr.mxu0 0.0
        %936 = vmatpush1.msra.mxu0 0.0
        %937 = vmatprep.subr.mxu0 0.0
        %938 = vmatpush1.msra.mxu0 0.0
        %939 = vmatprep.subr.mxu0 0.0
        %940 = vmatpush1.msra.mxu0 0.0
        %941 = vmatprep.subr.mxu0 0.0
        %942 = vmatpush1.msra.mxu0 0.0
        %943 = vmatprep.subr.mxu0 0.0
        %944 = vmatpush1.msra.mxu0 0.0
        %945 = vmatprep.subr.mxu0 0.0
        %946 = vmatpush1.msra.mxu0 0.0
        %947 = vmatprep.subr.mxu0 0.0
        %948 = vmatpush1.msra.mxu0 0.0
        %949 = vmatprep.subr.mxu0 0.0
        %950 = vmatpush1.msra.mxu0 0.0
        %951 = vmatprep.subr.mxu0 0.0
        %952 = vmatpush1.msra.mxu0 0.0
        %953 = vmatprep.subr.mxu0 0.0
        %954 = vmatpush1.msra.mxu0 0.0
        %955 = vmatprep.subr.mxu0 0.0
        %956 = vmatpush1.msra.mxu0 0.0
        %957 = vmatprep.subr.mxu0 0.0
        %958 = vmatpush1.msra.mxu0 0.0
        %959 = vmatprep.subr.mxu0 0.0
        %960 = vmatpush1.msra.mxu0 0.0
        %961 = vmatprep.subr.mxu0 0.0
        %962 = vmatpush1.msra.mxu0 0.0
        %963 = vmatprep.subr.mxu0 0.0
        %964 = vmatpush1.msra.mxu0 0.0
        %965 = vmatprep.subr.mxu0 0.0
        %966 = vmatpush1.msra.mxu0 0.0
        %967 = vmatprep.subr.mxu0 0.0
        %968 = vmatpush1.msra.mxu0 0.0
        %969 = vmatprep.subr.mxu0 0.0
        %970 = vmatpush1.msra.mxu0 0.0
        %971 = vmatprep.mubr.f32.mxu0 0.0
        %972 = vmatmul.mubr.f32.gmra.mrb[0].mxu0 %v803
        %v973 = vpop.f32.mrb[0].mxu0
        %v974 = vadd.f32 0.0, %v973
        %v975 = vpop.f32.mrb[0].mxu0
        %976 = vdwg.mxu0
        %v977 = vadd.f32 %v906, %v974
        %v978 = vtanh.pop %v977
        %v979 = vmul.f32 %v978, 0.5
        %v980 = vadd.f32 %v979, 0.5
        %v981 = vmul.f32 %v980, %v720
        %983 = vrot.lane.b32.xlu0 %v978, 32
        %v984 = vpop.permute.xlu0 %983
        %v986 = vmul.f32 %v980, %v984
        %988 = vrot.lane.b32.xlu0 %v986, 32
        %v989 = vpop.permute.xlu0 %988
        %v991 = vadd.f32 %v981, %v989
        %v992 = vtanh.pop %v991
        %994 = vrot.lane.b32.xlu0 %v992, 32
        %v995 = vpop.permute.xlu0 %994
        %v997 = vmul.f32 %v980, %v995
        %v998 = vsel %vm628, %v902, 0
        %1000 = vmatprep.subr.mxu0 0.0
        %1001 = vmatpush1.msra.mxu0 %v610
        %1002 = vmatprep.subr.mxu0 0.0
        %1003 = vmatpush1.msra.mxu0 %v611
        %1004 = vmatprep.subr.mxu0 0.0
        %1005 = vmatpush1.msra.mxu0 %v612
        %1006 = vmatprep.subr.mxu0 0.0
        %1007 = vmatpush1.msra.mxu0 %v613
        %1008 = vmatprep.subr.mxu0 0.0
        %1009 = vmatpush1.msra.mxu0 0.0
        %1010 = vmatprep.subr.mxu0 0.0
        %1011 = vmatpush1.msra.mxu0 0.0
        %1012 = vmatprep.subr.mxu0 0.0
        %1013 = vmatpush1.msra.mxu0 0.0
        %1014 = vmatprep.subr.mxu0 0.0
        %1015 = vmatpush1.msra.mxu0 0.0
        %1016 = vmatprep.subr.mxu0 0.0
        %1017 = vmatpush1.msra.mxu0 0.0
        %1018 = vmatprep.subr.mxu0 0.0
        %1019 = vmatpush1.msra.mxu0 0.0
        %1020 = vmatprep.subr.mxu0 0.0
        %1021 = vmatpush1.msra.mxu0 0.0
        %1022 = vmatprep.subr.mxu0 0.0
        %1023 = vmatpush1.msra.mxu0 0.0
        %1024 = vmatprep.subr.mxu0 0.0
        %1025 = vmatpush1.msra.mxu0 0.0
        %1026 = vmatprep.subr.mxu0 0.0
        %1027 = vmatpush1.msra.mxu0 0.0
        %1028 = vmatprep.subr.mxu0 0.0
        %1029 = vmatpush1.msra.mxu0 0.0
        %1030 = vmatprep.subr.mxu0 0.0
        %1031 = vmatpush1.msra.mxu0 0.0
        %1032 = vmatprep.subr.mxu0 0.0
        %1033 = vmatpush1.msra.mxu0 0.0
        %1034 = vmatprep.subr.mxu0 0.0
        %1035 = vmatpush1.msra.mxu0 0.0
        %1036 = vmatprep.subr.mxu0 0.0
        %1037 = vmatpush1.msra.mxu0 0.0
        %1038 = vmatprep.subr.mxu0 0.0
        %1039 = vmatpush1.msra.mxu0 0.0
        %1040 = vmatprep.subr.mxu0 0.0
        %1041 = vmatpush1.msra.mxu0 0.0
        %1042 = vmatprep.subr.mxu0 0.0
        %1043 = vmatpush1.msra.mxu0 0.0
        %1044 = vmatprep.subr.mxu0 0.0
        %1045 = vmatpush1.msra.mxu0 0.0
        %1046 = vmatprep.subr.mxu0 0.0
        %1047 = vmatpush1.msra.mxu0 0.0
        %1048 = vmatprep.subr.mxu0 0.0
        %1049 = vmatpush1.msra.mxu0 0.0
        %1050 = vmatprep.subr.mxu0 0.0
        %1051 = vmatpush1.msra.mxu0 0.0
        %1052 = vmatprep.subr.mxu0 0.0
        %1053 = vmatpush1.msra.mxu0 0.0
        %1054 = vmatprep.subr.mxu0 0.0
        %1055 = vmatpush1.msra.mxu0 0.0
        %1056 = vmatprep.subr.mxu0 0.0
        %1057 = vmatpush1.msra.mxu0 0.0
        %1058 = vmatprep.subr.mxu0 0.0
        %1059 = vmatpush1.msra.mxu0 0.0
        %1060 = vmatprep.subr.mxu0 0.0
        %1061 = vmatpush1.msra.mxu0 0.0
        %1062 = vmatprep.subr.mxu0 0.0
        %1063 = vmatpush1.msra.mxu0 0.0
        %1064 = vmatprep.mubr.f32.mxu0 0.0
        %1065 = vmatmul.mubr.f32.gmra.mrb[0].mxu0 %v998
        %v1066 = vpop.f32.mrb[0].mxu0
        %v1067 = vadd.f32 0.0, %v1066
        %v1068 = vpop.f32.mrb[0].mxu0
        %1069 = vdwg.mxu0
        %1071 = vrot.lane.b32.xlu0 %v997, 64
        %v1072 = vpop.permute.xlu0 %1071
        %v1073 = vsel %vm628, %v1072, 0
        %1075 = vmatprep.subr.mxu0 0.0
        %1076 = vmatpush1.msra.mxu0 %v606
        %1077 = vmatprep.subr.mxu0 0.0
        %1078 = vmatpush1.msra.mxu0 %v607
        %1079 = vmatprep.subr.mxu0 0.0
        %1080 = vmatpush1.msra.mxu0 %v608
        %1081 = vmatprep.subr.mxu0 0.0
        %1082 = vmatpush1.msra.mxu0 %v609
        %1083 = vmatprep.subr.mxu0 0.0
        %1084 = vmatpush1.msra.mxu0 0.0
        %1085 = vmatprep.subr.mxu0 0.0
        %1086 = vmatpush1.msra.mxu0 0.0
        %1087 = vmatprep.subr.mxu0 0.0
        %1088 = vmatpush1.msra.mxu0 0.0
        %1089 = vmatprep.subr.mxu0 0.0
        %1090 = vmatpush1.msra.mxu0 0.0
        %1091 = vmatprep.subr.mxu0 0.0
        %1092 = vmatpush1.msra.mxu0 0.0
        %1093 = vmatprep.subr.mxu0 0.0
        %1094 = vmatpush1.msra.mxu0 0.0
        %1095 = vmatprep.subr.mxu0 0.0
        %1096 = vmatpush1.msra.mxu0 0.0
        %1097 = vmatprep.subr.mxu0 0.0
        %1098 = vmatpush1.msra.mxu0 0.0
        %1099 = vmatprep.subr.mxu0 0.0
        %1100 = vmatpush1.msra.mxu0 0.0
        %1101 = vmatprep.subr.mxu0 0.0
        %1102 = vmatpush1.msra.mxu0 0.0
        %1103 = vmatprep.subr.mxu0 0.0
        %1104 = vmatpush1.msra.mxu0 0.0
        %1105 = vmatprep.subr.mxu0 0.0
        %1106 = vmatpush1.msra.mxu0 0.0
        %1107 = vmatprep.subr.mxu0 0.0
        %1108 = vmatpush1.msra.mxu0 0.0
        %1109 = vmatprep.subr.mxu0 0.0
        %1110 = vmatpush1.msra.mxu0 0.0
        %1111 = vmatprep.subr.mxu0 0.0
        %1112 = vmatpush1.msra.mxu0 0.0
        %1113 = vmatprep.subr.mxu0 0.0
        %1114 = vmatpush1.msra.mxu0 0.0
        %1115 = vmatprep.subr.mxu0 0.0
        %1116 = vmatpush1.msra.mxu0 0.0
        %1117 = vmatprep.subr.mxu0 0.0
        %1118 = vmatpush1.msra.mxu0 0.0
        %1119 = vmatprep.subr.mxu0 0.0
        %1120 = vmatpush1.msra.mxu0 0.0
        %1121 = vmatprep.subr.mxu0 0.0
        %1122 = vmatpush1.msra.mxu0 0.0
        %1123 = vmatprep.subr.mxu0 0.0
        %1124 = vmatpush1.msra.mxu0 0.0
        %1125 = vmatprep.subr.mxu0 0.0
        %1126 = vmatpush1.msra.mxu0 0.0
        %1127 = vmatprep.subr.mxu0 0.0
        %1128 = vmatpush1.msra.mxu0 0.0
        %1129 = vmatprep.subr.mxu0 0.0
        %1130 = vmatpush1.msra.mxu0 0.0
        %1131 = vmatprep.subr.mxu0 0.0
        %1132 = vmatpush1.msra.mxu0 0.0
        %1133 = vmatprep.subr.mxu0 0.0
        %1134 = vmatpush1.msra.mxu0 0.0
        %1135 = vmatprep.subr.mxu0 0.0
        %1136 = vmatpush1.msra.mxu0 0.0
        %1137 = vmatprep.subr.mxu0 0.0
        %1138 = vmatpush1.msra.mxu0 0.0
        %1139 = vmatprep.mubr.f32.mxu0 0.0
        %1140 = vmatmul.mubr.f32.gmra.mrb[0].mxu0 %v1073
        %v1141 = vpop.f32.mrb[0].mxu0
        %v1142 = vadd.f32 %v1067, %v1141
        %v1143 = vpop.f32.mrb[0].mxu0
        %1144 = vdwg.mxu0
        %v1145 = vadd.f32 %v1142, %v619
        %v1146 = vtanh.pop %v1145
        %v1147 = vmul.f32 %v1146, 0.5
        %v1148 = vadd.f32 %v1147, 0.5
        %v1149 = vmul.f32 %v1148, %v893
        %1151 = vrot.lane.b32.xlu0 %v1146, 32
        %v1152 = vpop.permute.xlu0 %1151
        %v1154 = vmul.f32 %v1148, %v1152
        %1156 = vrot.lane.b32.xlu0 %v1154, 32
        %v1157 = vpop.permute.xlu0 %1156
        %v1159 = vadd.f32 %v1149, %v1157
        %v1160 = vtanh.pop %v1159
        %1162 = vrot.lane.b32.xlu0 %v1160, 32
        %v1163 = vpop.permute.xlu0 %1162
        %v1165 = vmul.f32 %v1148, %v1163
        %1167 = vrot.lane.b32.xlu0 %v1165, 64
        %v1168 = vpop.permute.xlu0 %1167
        %s1170 = scalar_lea.vmem %s452, 8 [#allocation10]
        %1171 = vst.msk [vmem:[%s1170] sm:$0xff] %vm628, %v1168
        %s1172 = scalar_lea.vmem [#allocation2], 16
        %v1173 = vld [vmem:[%s1172] sm:$0xff]
        %1174 = vmatprep.subr.mxu0 0.0
        %1175 = vmatpush1.msra.mxu0 %v602
        %1176 = vmatprep.subr.mxu0 0.0
        %1177 = vmatpush1.msra.mxu0 %v603
        %1178 = vmatprep.subr.mxu0 0.0
        %1179 = vmatpush1.msra.mxu0 %v604
        %1180 = vmatprep.subr.mxu0 0.0
        %1181 = vmatpush1.msra.mxu0 %v605
        %1182 = vmatprep.subr.mxu0 0.0
        %1183 = vmatpush1.msra.mxu0 0.0
        %1184 = vmatprep.subr.mxu0 0.0
        %1185 = vmatpush1.msra.mxu0 0.0
        %1186 = vmatprep.subr.mxu0 0.0
        %1187 = vmatpush1.msra.mxu0 0.0
        %1188 = vmatprep.subr.mxu0 0.0
        %1189 = vmatpush1.msra.mxu0 0.0
        %1190 = vmatprep.subr.mxu0 0.0
        %1191 = vmatpush1.msra.mxu0 0.0
        %1192 = vmatprep.subr.mxu0 0.0
        %1193 = vmatpush1.msra.mxu0 0.0
        %1194 = vmatprep.subr.mxu0 0.0
        %1195 = vmatpush1.msra.mxu0 0.0
        %1196 = vmatprep.subr.mxu0 0.0
        %1197 = vmatpush1.msra.mxu0 0.0
        %1198 = vmatprep.subr.mxu0 0.0
        %1199 = vmatpush1.msra.mxu0 0.0
        %1200 = vmatprep.subr.mxu0 0.0
        %1201 = vmatpush1.msra.mxu0 0.0
        %1202 = vmatprep.subr.mxu0 0.0
        %1203 = vmatpush1.msra.mxu0 0.0
        %1204 = vmatprep.subr.mxu0 0.0
        %1205 = vmatpush1.msra.mxu0 0.0
        %1206 = vmatprep.subr.mxu0 0.0
        %1207 = vmatpush1.msra.mxu0 0.0
        %1208 = vmatprep.subr.mxu0 0.0
        %1209 = vmatpush1.msra.mxu0 0.0
        %1210 = vmatprep.subr.mxu0 0.0
        %1211 = vmatpush1.msra.mxu0 0.0
        %1212 = vmatprep.subr.mxu0 0.0
        %1213 = vmatpush1.msra.mxu0 0.0
        %1214 = vmatprep.subr.mxu0 0.0
        %1215 = vmatpush1.msra.mxu0 0.0
        %1216 = vmatprep.subr.mxu0 0.0
        %1217 = vmatpush1.msra.mxu0 0.0
        %1218 = vmatprep.subr.mxu0 0.0
        %1219 = vmatpush1.msra.mxu0 0.0
        %1220 = vmatprep.subr.mxu0 0.0
        %1221 = vmatpush1.msra.mxu0 0.0
        %1222 = vmatprep.subr.mxu0 0.0
        %1223 = vmatpush1.msra.mxu0 0.0
        %1224 = vmatprep.subr.mxu0 0.0
        %1225 = vmatpush1.msra.mxu0 0.0
        %1226 = vmatprep.subr.mxu0 0.0
        %1227 = vmatpush1.msra.mxu0 0.0
        %1228 = vmatprep.subr.mxu0 0.0
        %1229 = vmatpush1.msra.mxu0 0.0
        %1230 = vmatprep.subr.mxu0 0.0
        %1231 = vmatpush1.msra.mxu0 0.0
        %1232 = vmatprep.subr.mxu0 0.0
        %1233 = vmatpush1.msra.mxu0 0.0
        %1234 = vmatprep.subr.mxu0 0.0
        %1235 = vmatpush1.msra.mxu0 0.0
        %1236 = vmatprep.subr.mxu0 0.0
        %1237 = vmatpush1.msra.mxu0 0.0
        %1238 = vmatprep.mubr.f32.mxu0 0.0
        %1239 = vmatmul.mubr.f32.gmra.mrb[0].mxu0 %v1073
        %v1240 = vpop.f32.mrb[0].mxu0
        %v1241 = vadd.f32 0.0, %v1240
        %v1242 = vpop.f32.mrb[0].mxu0
        %1243 = vdwg.mxu0
        %v1244 = vadd.f32 %v1173, %v1241
        %v1245 = vtanh.pop %v1244
        %v1246 = vmul.f32 %v1245, 0.5
        %v1247 = vadd.f32 %v1246, 0.5
        %v1248 = vmul.f32 %v1247, %v991
        %1250 = vrot.lane.b32.xlu0 %v1245, 32
        %v1251 = vpop.permute.xlu0 %1250
        %v1253 = vmul.f32 %v1247, %v1251
        %1255 = vrot.lane.b32.xlu0 %v1253, 32
        %v1256 = vpop.permute.xlu0 %1255
        %v1258 = vadd.f32 %v1248, %v1256
        %v1259 = vtanh.pop %v1258
        %1261 = vrot.lane.b32.xlu0 %v1259, 32
        %v1262 = vpop.permute.xlu0 %1261
        %v1264 = vmul.f32 %v1247, %v1262
        %v1265 = vsel %vm628, %v1168, 0
        %1267 = vmatprep.subr.mxu0 0.0
        %1268 = vmatpush1.msra.mxu0 %v610
        %1269 = vmatprep.subr.mxu0 0.0
        %1270 = vmatpush1.msra.mxu0 %v611
        %1271 = vmatprep.subr.mxu0 0.0
        %1272 = vmatpush1.msra.mxu0 %v612
        %1273 = vmatprep.subr.mxu0 0.0
        %1274 = vmatpush1.msra.mxu0 %v613
        %1275 = vmatprep.subr.mxu0 0.0
        %1276 = vmatpush1.msra.mxu0 0.0
        %1277 = vmatprep.subr.mxu0 0.0
        %1278 = vmatpush1.msra.mxu0 0.0
        %1279 = vmatprep.subr.mxu0 0.0
        %1280 = vmatpush1.msra.mxu0 0.0
        %1281 = vmatprep.subr.mxu0 0.0
        %1282 = vmatpush1.msra.mxu0 0.0
        %1283 = vmatprep.subr.mxu0 0.0
        %1284 = vmatpush1.msra.mxu0 0.0
        %1285 = vmatprep.subr.mxu0 0.0
        %1286 = vmatpush1.msra.mxu0 0.0
        %1287 = vmatprep.subr.mxu0 0.0
        %1288 = vmatpush1.msra.mxu0 0.0
        %1289 = vmatprep.subr.mxu0 0.0
        %1290 = vmatpush1.msra.mxu0 0.0
        %1291 = vmatprep.subr.mxu0 0.0
        %1292 = vmatpush1.msra.mxu0 0.0
        %1293 = vmatprep.subr.mxu0 0.0
        %1294 = vmatpush1.msra.mxu0 0.0
        %1295 = vmatprep.subr.mxu0 0.0
        %1296 = vmatpush1.msra.mxu0 0.0
        %1297 = vmatprep.subr.mxu0 0.0
        %1298 = vmatpush1.msra.mxu0 0.0
        %1299 = vmatprep.subr.mxu0 0.0
        %1300 = vmatpush1.msra.mxu0 0.0
        %1301 = vmatprep.subr.mxu0 0.0
        %1302 = vmatpush1.msra.mxu0 0.0
        %1303 = vmatprep.subr.mxu0 0.0
        %1304 = vmatpush1.msra.mxu0 0.0
        %1305 = vmatprep.subr.mxu0 0.0
        %1306 = vmatpush1.msra.mxu0 0.0
        %1307 = vmatprep.subr.mxu0 0.0
        %1308 = vmatpush1.msra.mxu0 0.0
        %1309 = vmatprep.subr.mxu0 0.0
        %1310 = vmatpush1.msra.mxu0 0.0
        %1311 = vmatprep.subr.mxu0 0.0
        %1312 = vmatpush1.msra.mxu0 0.0
        %1313 = vmatprep.subr.mxu0 0.0
        %1314 = vmatpush1.msra.mxu0 0.0
        %1315 = vmatprep.subr.mxu0 0.0
        %1316 = vmatpush1.msra.mxu0 0.0
        %1317 = vmatprep.subr.mxu0 0.0
        %1318 = vmatpush1.msra.mxu0 0.0
        %1319 = vmatprep.subr.mxu0 0.0
        %1320 = vmatpush1.msra.mxu0 0.0
        %1321 = vmatprep.subr.mxu0 0.0
        %1322 = vmatpush1.msra.mxu0 0.0
        %1323 = vmatprep.subr.mxu0 0.0
        %1324 = vmatpush1.msra.mxu0 0.0
        %1325 = vmatprep.subr.mxu0 0.0
        %1326 = vmatpush1.msra.mxu0 0.0
        %1327 = vmatprep.subr.mxu0 0.0
        %1328 = vmatpush1.msra.mxu0 0.0
        %1329 = vmatprep.subr.mxu0 0.0
        %1330 = vmatpush1.msra.mxu0 0.0
        %1331 = vmatprep.mubr.f32.mxu0 0.0
        %1332 = vmatmul.mubr.f32.gmra.mrb[0].mxu0 %v1265
        %v1333 = vpop.f32.mrb[0].mxu0
        %v1334 = vadd.f32 0.0, %v1333
        %v1335 = vpop.f32.mrb[0].mxu0
        %1336 = vdwg.mxu0
        %1338 = vrot.lane.b32.xlu0 %v1264, 64
        %v1339 = vpop.permute.xlu0 %1338
        %v1340 = vsel %vm628, %v1339, 0
        %1342 = vmatprep.subr.mxu0 0.0
        %1343 = vmatpush1.msra.mxu0 %v606
        %1344 = vmatprep.subr.mxu0 0.0
        %1345 = vmatpush1.msra.mxu0 %v607
        %1346 = vmatprep.subr.mxu0 0.0
        %1347 = vmatpush1.msra.mxu0 %v608
        %1348 = vmatprep.subr.mxu0 0.0
        %1349 = vmatpush1.msra.mxu0 %v609
        %1350 = vmatprep.subr.mxu0 0.0
        %1351 = vmatpush1.msra.mxu0 0.0
        %1352 = vmatprep.subr.mxu0 0.0
        %1353 = vmatpush1.msra.mxu0 0.0
        %1354 = vmatprep.subr.mxu0 0.0
        %1355 = vmatpush1.msra.mxu0 0.0
        %1356 = vmatprep.subr.mxu0 0.0
        %1357 = vmatpush1.msra.mxu0 0.0
        %1358 = vmatprep.subr.mxu0 0.0
        %1359 = vmatpush1.msra.mxu0 0.0
        %1360 = vmatprep.subr.mxu0 0.0
        %1361 = vmatpush1.msra.mxu0 0.0
        %1362 = vmatprep.subr.mxu0 0.0
        %1363 = vmatpush1.msra.mxu0 0.0
        %1364 = vmatprep.subr.mxu0 0.0
        %1365 = vmatpush1.msra.mxu0 0.0
        %1366 = vmatprep.subr.mxu0 0.0
        %1367 = vmatpush1.msra.mxu0 0.0
        %1368 = vmatprep.subr.mxu0 0.0
        %1369 = vmatpush1.msra.mxu0 0.0
        %1370 = vmatprep.subr.mxu0 0.0
        %1371 = vmatpush1.msra.mxu0 0.0
        %1372 = vmatprep.subr.mxu0 0.0
        %1373 = vmatpush1.msra.mxu0 0.0
        %1374 = vmatprep.subr.mxu0 0.0
        %1375 = vmatpush1.msra.mxu0 0.0
        %1376 = vmatprep.subr.mxu0 0.0
        %1377 = vmatpush1.msra.mxu0 0.0
        %1378 = vmatprep.subr.mxu0 0.0
        %1379 = vmatpush1.msra.mxu0 0.0
        %1380 = vmatprep.subr.mxu0 0.0
        %1381 = vmatpush1.msra.mxu0 0.0
        %1382 = vmatprep.subr.mxu0 0.0
        %1383 = vmatpush1.msra.mxu0 0.0
        %1384 = vmatprep.subr.mxu0 0.0
        %1385 = vmatpush1.msra.mxu0 0.0
        %1386 = vmatprep.subr.mxu0 0.0
        %1387 = vmatpush1.msra.mxu0 0.0
        %1388 = vmatprep.subr.mxu0 0.0
        %1389 = vmatpush1.msra.mxu0 0.0
        %1390 = vmatprep.subr.mxu0 0.0
        %1391 = vmatpush1.msra.mxu0 0.0
        %1392 = vmatprep.subr.mxu0 0.0
        %1393 = vmatpush1.msra.mxu0 0.0
        %1394 = vmatprep.subr.mxu0 0.0
        %1395 = vmatpush1.msra.mxu0 0.0
        %1396 = vmatprep.subr.mxu0 0.0
        %1397 = vmatpush1.msra.mxu0 0.0
        %1398 = vmatprep.subr.mxu0 0.0
        %1399 = vmatpush1.msra.mxu0 0.0
        %1400 = vmatprep.subr.mxu0 0.0
        %1401 = vmatpush1.msra.mxu0 0.0
        %1402 = vmatprep.subr.mxu0 0.0
        %1403 = vmatpush1.msra.mxu0 0.0
        %1404 = vmatprep.subr.mxu0 0.0
        %1405 = vmatpush1.msra.mxu0 0.0
        %1406 = vmatprep.mubr.f32.mxu0 0.0
        %1407 = vmatmul.mubr.f32.gmra.mrb[0].mxu0 %v1340
        %v1408 = vpop.f32.mrb[0].mxu0
        %v1409 = vadd.f32 %v1334, %v1408
        %v1410 = vpop.f32.mrb[0].mxu0
        %1411 = vdwg.mxu0
        %v1412 = vadd.f32 %v1409, %v619
        %v1413 = vtanh.pop %v1412
        %v1414 = vmul.f32 %v1413, 0.5
        %v1415 = vadd.f32 %v1414, 0.5
        %v1416 = vmul.f32 %v1415, %v1159
        %1418 = vrot.lane.b32.xlu0 %v1413, 32
        %v1419 = vpop.permute.xlu0 %1418
        %v1421 = vmul.f32 %v1415, %v1419
        %1423 = vrot.lane.b32.xlu0 %v1421, 32
        %v1424 = vpop.permute.xlu0 %1423
        %v1426 = vadd.f32 %v1416, %v1424
        %v1427 = vtanh.pop %v1426
        %1429 = vrot.lane.b32.xlu0 %v1427, 32
        %v1430 = vpop.permute.xlu0 %1429
        %v1432 = vmul.f32 %v1415, %v1430
        %1434 = vrot.lane.b32.xlu0 %v1432, 64
        %v1435 = vpop.permute.xlu0 %1434
        %s1437 = scalar_lea.vmem %s452, 16 [#allocation10]
        %1438 = vst.msk [vmem:[%s1437] sm:$0xff] %vm628, %v1435
        %s1439 = scalar_lea.vmem [#allocation2], 24
        %v1440 = vld [vmem:[%s1439] sm:$0xff]
        %1441 = vmatprep.subr.mxu0 0.0
        %1442 = vmatpush1.msra.mxu0 %v602
        %1443 = vmatprep.subr.mxu0 0.0
        %1444 = vmatpush1.msra.mxu0 %v603
        %1445 = vmatprep.subr.mxu0 0.0
        %1446 = vmatpush1.msra.mxu0 %v604
        %1447 = vmatprep.subr.mxu0 0.0
        %1448 = vmatpush1.msra.mxu0 %v605
        %1449 = vmatprep.subr.mxu0 0.0
        %1450 = vmatpush1.msra.mxu0 0.0
        %1451 = vmatprep.subr.mxu0 0.0
        %1452 = vmatpush1.msra.mxu0 0.0
        %1453 = vmatprep.subr.mxu0 0.0
        %1454 = vmatpush1.msra.mxu0 0.0
        %1455 = vmatprep.subr.mxu0 0.0
        %1456 = vmatpush1.msra.mxu0 0.0
        %1457 = vmatprep.subr.mxu0 0.0
        %1458 = vmatpush1.msra.mxu0 0.0
        %1459 = vmatprep.subr.mxu0 0.0
        %1460 = vmatpush1.msra.mxu0 0.0
        %1461 = vmatprep.subr.mxu0 0.0
        %1462 = vmatpush1.msra.mxu0 0.0
        %1463 = vmatprep.subr.mxu0 0.0
        %1464 = vmatpush1.msra.mxu0 0.0
        %1465 = vmatprep.subr.mxu0 0.0
        %1466 = vmatpush1.msra.mxu0 0.0
        %1467 = vmatprep.subr.mxu0 0.0
        %1468 = vmatpush1.msra.mxu0 0.0
        %1469 = vmatprep.subr.mxu0 0.0
        %1470 = vmatpush1.msra.mxu0 0.0
        %1471 = vmatprep.subr.mxu0 0.0
        %1472 = vmatpush1.msra.mxu0 0.0
        %1473 = vmatprep.subr.mxu0 0.0
        %1474 = vmatpush1.msra.mxu0 0.0
        %1475 = vmatprep.subr.mxu0 0.0
        %1476 = vmatpush1.msra.mxu0 0.0
        %1477 = vmatprep.subr.mxu0 0.0
        %1478 = vmatpush1.msra.mxu0 0.0
        %1479 = vmatprep.subr.mxu0 0.0
        %1480 = vmatpush1.msra.mxu0 0.0
        %1481 = vmatprep.subr.mxu0 0.0
        %1482 = vmatpush1.msra.mxu0 0.0
        %1483 = vmatprep.subr.mxu0 0.0
        %1484 = vmatpush1.msra.mxu0 0.0
        %1485 = vmatprep.subr.mxu0 0.0
        %1486 = vmatpush1.msra.mxu0 0.0
        %1487 = vmatprep.subr.mxu0 0.0
        %1488 = vmatpush1.msra.mxu0 0.0
        %1489 = vmatprep.subr.mxu0 0.0
        %1490 = vmatpush1.msra.mxu0 0.0
        %1491 = vmatprep.subr.mxu0 0.0
        %1492 = vmatpush1.msra.mxu0 0.0
        %1493 = vmatprep.subr.mxu0 0.0
        %1494 = vmatpush1.msra.mxu0 0.0
        %1495 = vmatprep.subr.mxu0 0.0
        %1496 = vmatpush1.msra.mxu0 0.0
        %1497 = vmatprep.subr.mxu0 0.0
        %1498 = vmatpush1.msra.mxu0 0.0
        %1499 = vmatprep.subr.mxu0 0.0
        %1500 = vmatpush1.msra.mxu0 0.0
        %1501 = vmatprep.subr.mxu0 0.0
        %1502 = vmatpush1.msra.mxu0 0.0
        %1503 = vmatprep.subr.mxu0 0.0
        %1504 = vmatpush1.msra.mxu0 0.0
        %1505 = vmatprep.mubr.f32.mxu0 0.0
        %1506 = vmatmul.mubr.f32.gmra.mrb[0].mxu0 %v1340
        %v1507 = vpop.f32.mrb[0].mxu0
        %v1508 = vadd.f32 0.0, %v1507
        %v1509 = vpop.f32.mrb[0].mxu0
        %1510 = vdwg.mxu0
        %v1511 = vadd.f32 %v1440, %v1508
        %v1512 = vtanh.pop %v1511
        %v1513 = vmul.f32 %v1512, 0.5
        %v1514 = vadd.f32 %v1513, 0.5
        %v1515 = vmul.f32 %v1514, %v1258
        %1517 = vrot.lane.b32.xlu0 %v1512, 32
        %v1518 = vpop.permute.xlu0 %1517
        %v1520 = vmul.f32 %v1514, %v1518
        %1522 = vrot.lane.b32.xlu0 %v1520, 32
        %v1523 = vpop.permute.xlu0 %1522
        %v1525 = vadd.f32 %v1515, %v1523
        %v1526 = vtanh.pop %v1525
        %1528 = vrot.lane.b32.xlu0 %v1526, 32
        %v1529 = vpop.permute.xlu0 %1528
        %v1531 = vmul.f32 %v1514, %v1529
        %v1532 = vsel %vm628, %v1435, 0
        %1534 = vmatprep.subr.mxu0 0.0
        %1535 = vmatpush1.msra.mxu0 %v610
        %1536 = vmatprep.subr.mxu0 0.0
        %1537 = vmatpush1.msra.mxu0 %v611
        %1538 = vmatprep.subr.mxu0 0.0
        %1539 = vmatpush1.msra.mxu0 %v612
        %1540 = vmatprep.subr.mxu0 0.0
        %1541 = vmatpush1.msra.mxu0 %v613
        %1542 = vmatprep.subr.mxu0 0.0
        %1543 = vmatpush1.msra.mxu0 0.0
        %1544 = vmatprep.subr.mxu0 0.0
        %1545 = vmatpush1.msra.mxu0 0.0
        %1546 = vmatprep.subr.mxu0 0.0
        %1547 = vmatpush1.msra.mxu0 0.0
        %1548 = vmatprep.subr.mxu0 0.0
        %1549 = vmatpush1.msra.mxu0 0.0
        %1550 = vmatprep.subr.mxu0 0.0
        %1551 = vmatpush1.msra.mxu0 0.0
        %1552 = vmatprep.subr.mxu0 0.0
        %1553 = vmatpush1.msra.mxu0 0.0
        %1554 = vmatprep.subr.mxu0 0.0
        %1555 = vmatpush1.msra.mxu0 0.0
        %1556 = vmatprep.subr.mxu0 0.0
        %1557 = vmatpush1.msra.mxu0 0.0
        %1558 = vmatprep.subr.mxu0 0.0
        %1559 = vmatpush1.msra.mxu0 0.0
        %1560 = vmatprep.subr.mxu0 0.0
        %1561 = vmatpush1.msra.mxu0 0.0
        %1562 = vmatprep.subr.mxu0 0.0
        %1563 = vmatpush1.msra.mxu0 0.0
        %1564 = vmatprep.subr.mxu0 0.0
        %1565 = vmatpush1.msra.mxu0 0.0
        %1566 = vmatprep.subr.mxu0 0.0
        %1567 = vmatpush1.msra.mxu0 0.0
        %1568 = vmatprep.subr.mxu0 0.0
        %1569 = vmatpush1.msra.mxu0 0.0
        %1570 = vmatprep.subr.mxu0 0.0
        %1571 = vmatpush1.msra.mxu0 0.0
        %1572 = vmatprep.subr.mxu0 0.0
        %1573 = vmatpush1.msra.mxu0 0.0
        %1574 = vmatprep.subr.mxu0 0.0
        %1575 = vmatpush1.msra.mxu0 0.0
        %1576 = vmatprep.subr.mxu0 0.0
        %1577 = vmatpush1.msra.mxu0 0.0
        %1578 = vmatprep.subr.mxu0 0.0
        %1579 = vmatpush1.msra.mxu0 0.0
        %1580 = vmatprep.subr.mxu0 0.0
        %1581 = vmatpush1.msra.mxu0 0.0
        %1582 = vmatprep.subr.mxu0 0.0
        %1583 = vmatpush1.msra.mxu0 0.0
        %1584 = vmatprep.subr.mxu0 0.0
        %1585 = vmatpush1.msra.mxu0 0.0
        %1586 = vmatprep.subr.mxu0 0.0
        %1587 = vmatpush1.msra.mxu0 0.0
        %1588 = vmatprep.subr.mxu0 0.0
        %1589 = vmatpush1.msra.mxu0 0.0
        %1590 = vmatprep.subr.mxu0 0.0
        %1591 = vmatpush1.msra.mxu0 0.0
        %1592 = vmatprep.subr.mxu0 0.0
        %1593 = vmatpush1.msra.mxu0 0.0
        %1594 = vmatprep.subr.mxu0 0.0
        %1595 = vmatpush1.msra.mxu0 0.0
        %1596 = vmatprep.subr.mxu0 0.0
        %1597 = vmatpush1.msra.mxu0 0.0
        %1598 = vmatprep.mubr.f32.mxu0 0.0
        %1599 = vmatmul.mubr.f32.gmra.mrb[0].mxu0 %v1532
        %v1600 = vpop.f32.mrb[0].mxu0
        %v1601 = vadd.f32 0.0, %v1600
        %v1602 = vpop.f32.mrb[0].mxu0
        %1603 = vdwg.mxu0
        %1605 = vrot.lane.b32.xlu0 %v1531, 64
        %v1606 = vpop.permute.xlu0 %1605
        %v1607 = vsel %vm628, %v1606, 0
        %1609 = vmatprep.subr.mxu0 0.0
        %1610 = vmatpush1.msra.mxu0 %v606
        %1611 = vmatprep.subr.mxu0 0.0
        %1612 = vmatpush1.msra.mxu0 %v607
        %1613 = vmatprep.subr.mxu0 0.0
        %1614 = vmatpush1.msra.mxu0 %v608
        %1615 = vmatprep.subr.mxu0 0.0
        %1616 = vmatpush1.msra.mxu0 %v609
        %1617 = vmatprep.subr.mxu0 0.0
        %1618 = vmatpush1.msra.mxu0 0.0
        %1619 = vmatprep.subr.mxu0 0.0
        %1620 = vmatpush1.msra.mxu0 0.0
        %1621 = vmatprep.subr.mxu0 0.0
        %1622 = vmatpush1.msra.mxu0 0.0
        %1623 = vmatprep.subr.mxu0 0.0
        %1624 = vmatpush1.msra.mxu0 0.0
        %1625 = vmatprep.subr.mxu0 0.0
        %1626 = vmatpush1.msra.mxu0 0.0
        %1627 = vmatprep.subr.mxu0 0.0
        %1628 = vmatpush1.msra.mxu0 0.0
        %1629 = vmatprep.subr.mxu0 0.0
        %1630 = vmatpush1.msra.mxu0 0.0
        %1631 = vmatprep.subr.mxu0 0.0
        %1632 = vmatpush1.msra.mxu0 0.0
        %1633 = vmatprep.subr.mxu0 0.0
        %1634 = vmatpush1.msra.mxu0 0.0
        %1635 = vmatprep.subr.mxu0 0.0
        %1636 = vmatpush1.msra.mxu0 0.0
        %1637 = vmatprep.subr.mxu0 0.0
        %1638 = vmatpush1.msra.mxu0 0.0
        %1639 = vmatprep.subr.mxu0 0.0
        %1640 = vmatpush1.msra.mxu0 0.0
        %1641 = vmatprep.subr.mxu0 0.0
        %1642 = vmatpush1.msra.mxu0 0.0
        %1643 = vmatprep.subr.mxu0 0.0
        %1644 = vmatpush1.msra.mxu0 0.0
        %1645 = vmatprep.subr.mxu0 0.0
        %1646 = vmatpush1.msra.mxu0 0.0
        %1647 = vmatprep.subr.mxu0 0.0
        %1648 = vmatpush1.msra.mxu0 0.0
        %1649 = vmatprep.subr.mxu0 0.0
        %1650 = vmatpush1.msra.mxu0 0.0
        %1651 = vmatprep.subr.mxu0 0.0
        %1652 = vmatpush1.msra.mxu0 0.0
        %1653 = vmatprep.subr.mxu0 0.0
        %1654 = vmatpush1.msra.mxu0 0.0
        %1655 = vmatprep.subr.mxu0 0.0
        %1656 = vmatpush1.msra.mxu0 0.0
        %1657 = vmatprep.subr.mxu0 0.0
        %1658 = vmatpush1.msra.mxu0 0.0
        %1659 = vmatprep.subr.mxu0 0.0
        %1660 = vmatpush1.msra.mxu0 0.0
        %1661 = vmatprep.subr.mxu0 0.0
        %1662 = vmatpush1.msra.mxu0 0.0
        %1663 = vmatprep.subr.mxu0 0.0
        %1664 = vmatpush1.msra.mxu0 0.0
        %1665 = vmatprep.subr.mxu0 0.0
        %1666 = vmatpush1.msra.mxu0 0.0
        %1667 = vmatprep.subr.mxu0 0.0
        %1668 = vmatpush1.msra.mxu0 0.0
        %1669 = vmatprep.subr.mxu0 0.0
        %1670 = vmatpush1.msra.mxu0 0.0
        %1671 = vmatprep.subr.mxu0 0.0
        %1672 = vmatpush1.msra.mxu0 0.0
        %1673 = vmatprep.mubr.f32.mxu0 0.0
        %1674 = vmatmul.mubr.f32.gmra.mrb[0].mxu0 %v1607
        %v1675 = vpop.f32.mrb[0].mxu0
        %v1676 = vadd.f32 %v1601, %v1675
        %v1677 = vpop.f32.mrb[0].mxu0
        %1678 = vdwg.mxu0
        %v1679 = vadd.f32 %v1676, %v619
        %v1680 = vtanh.pop %v1679
        %v1681 = vmul.f32 %v1680, 0.5
        %v1682 = vadd.f32 %v1681, 0.5
        %v1683 = vmul.f32 %v1682, %v1426
        %1685 = vrot.lane.b32.xlu0 %v1680, 32
        %v1686 = vpop.permute.xlu0 %1685
        %v1688 = vmul.f32 %v1682, %v1686
        %1690 = vrot.lane.b32.xlu0 %v1688, 32
        %v1691 = vpop.permute.xlu0 %1690
        %v1693 = vadd.f32 %v1683, %v1691
        %v1694 = vtanh.pop %v1693
        %1696 = vrot.lane.b32.xlu0 %v1694, 32
        %v1697 = vpop.permute.xlu0 %1696
        %v1699 = vmul.f32 %v1682, %v1697
        %1701 = vrot.lane.b32.xlu0 %v1699, 64
        %v1702 = vpop.permute.xlu0 %1701
        %s1704 = scalar_lea.vmem %s452, 24 [#allocation10]
        %1705 = vst.msk [vmem:[%s1704] sm:$0xff] %vm628, %v1702
        %1707 = vst.msk [vmem:[#allocation3] sm:$0xff] %vm628, %v1606
        %1709 = vrot.lane.b32.xlu0 %v1525, 96
        %v1710 = vpop.permute.xlu0 %1709
        %1712 = vst.msk [vmem:[#allocation4] sm:$0xff] %vm628, %v1710
        %1713 = vst.msk [vmem:[%s622] sm:$0xff] %vm628, %v1702
        %1715 = vrot.lane.b32.xlu0 %v1693, 96
        %v1716 = vpop.permute.xlu0 %1715
        %1718 = vst.msk [vmem:[%s625] sm:$0xff] %vm628, %v1716
        %p1719 = scmp.eq.s32.totalorder %s34, 1
        // Predicated region
        $region69: #{tpu_custom_call.1} parent=55 // pred_check
          %p1720 = pneg %p1719
        $region70: #{tpu_custom_call.1} parent=55 // pred_check_branch
          %1722 = sbr.rel (%p1720) target = $region72
        $region71: #{tpu_custom_call.1} parent=55 // pred_region
          %v1723 = vld [vmem:[#allocation3] sm:$0xff]
          %v1724 = vld [vmem:[#allocation3 + $0x8] sm:$0xff]
          %1725 = vst.msk [vmem:[#allocation11] sm:$0xff] %vm628, %v1723
          %1726 = vst.msk [vmem:[#allocation11 + $0x8] sm:$0xff] %vm628, %v1724
          %v1727 = vld [vmem:[#allocation4] sm:$0xff]
          %v1728 = vld [vmem:[#allocation4 + $0x8] sm:$0xff]
          %1729 = vst.msk [vmem:[#allocation13] sm:$0xff] %vm628, %v1727
          %1730 = vst.msk [vmem:[#allocation13 + $0x8] sm:$0xff] %vm628, %v1728
        $region72: #{tpu_custom_call.1} parent=55 // pred_fallthru
          _
        %s1731 = sand.u32 %s257, 1
        %s1732 = scalar_lea.sflag [#allocation7], %s1731
        %s1733 = sand.u32 %s257, 1
        %s1734 = smul.addr %s1733, 32
        %s1735 = scalar_lea.vmem [#allocation10], %s1734
        // Predicated region
        $region73: #{tpu_custom_call.1} parent=55 // pred_check
          %p1736 = pneg %p267
        $region74: #{tpu_custom_call.1} parent=55 // pred_check_branch
          %1738 = sbr.rel (%p1736) target = $region76
        $region75: #{tpu_custom_call.1} parent=55 // pred_region
          %s1739 = smul.u32 4, %s34
          %s1741 = ssub.s32 512, 512
          %1742 = vsyncadd %s1732, %s1741
          %s1743 = sadd.s32 %s33, %s1739
          %s1744 = smul.addr %s1743, 128
          %s1745 = scalar_lea.hbm %s9, %s1744
          %s1746 = sshll.u32 %s1735, 4
          %s1747 = int_to_ptr.vmem [resolvable:$true] %s1746
          %1752 = dma.vmem_to_hbm [thread:$0]  %s1747, 512, %s1745, %s1732, 128, 128, 8
        $region76: #{tpu_custom_call.1} parent=55 // pred_fallthru
          _
        // Predicated region
        $region77: #{tpu_custom_call.1} parent=55 // pred_check
          %p1753 = pneg %p293
        $region78: #{tpu_custom_call.1} parent=55 // pred_check_branch
          %1755 = sbr.rel (%p1753) target = $region80
        $region79: #{tpu_custom_call.1} parent=55 // pred_region
          %s1757 = ssub.s32 256, 256
          %1758 = vsyncadd [#allocation12], %s1757
          %s1759 = smul.addr %s33, 128
          %s1760 = scalar_lea.hbm %s10, %s1759
          %s1761 = sshll.u32 [#allocation11], 4
          %s1762 = int_to_ptr.vmem [resolvable:$true] %s1761
          %1767 = dma.vmem_to_hbm [thread:$0]  %s1762, 256, %s1760, [#allocation12], 128, 128, 8
        $region80: #{tpu_custom_call.1} parent=55 // pred_fallthru
          _
        // Predicated region
        $region81: #{tpu_custom_call.1} parent=55 // pred_check
          %p1768 = pneg %p319
        $region82: #{tpu_custom_call.1} parent=55 // pred_check_branch
          %1770 = sbr.rel (%p1768) target = $region84
        $region83: #{tpu_custom_call.1} parent=55 // pred_region
          %s1772 = ssub.s32 256, 256
          %1773 = vsyncadd [#allocation12], %s1772
          %s1774 = smul.addr %s33, 128
          %s1775 = scalar_lea.hbm %s11, %s1774
          %s1776 = sshll.u32 [#allocation13], 4
          %s1777 = int_to_ptr.vmem [resolvable:$true] %s1776
          %1782 = dma.vmem_to_hbm [thread:$0]  %s1777, 256, %s1775, [#allocation12], 128, 128, 8
        $region84: #{tpu_custom_call.1} parent=55 // pred_fallthru
          _
        // Predicated region
        $region85: #{tpu_custom_call.1} parent=55 // pred_check
          %p1783 = pneg %p293
        $region86: #{tpu_custom_call.1} parent=55 // pred_check_branch
          %1785 = sbr.rel (%p1783) target = $region88
        $region87: #{tpu_custom_call.1} parent=55 // pred_region
          %1786 = dma.done [#allocation12], 256
        $region88: #{tpu_custom_call.1} parent=55 // pred_fallthru
          _
        // Predicated region
        $region89: #{tpu_custom_call.1} parent=55 // pred_check
          %p1787 = pneg %p319
        $region90: #{tpu_custom_call.1} parent=55 // pred_check_branch
          %1789 = sbr.rel (%p1787) target = $region92
        $region91: #{tpu_custom_call.1} parent=55 // pred_region
          %1790 = dma.done [#allocation12], 256
        $region92: #{tpu_custom_call.1} parent=55 // pred_fallthru
          _
      $region56: #{tpu_custom_call.1} parent=5 // pred_fallthru
        _
      %p1791 = scmp.le.s32.totalorder 2, %s24
      // Predicated region
      $region93: #{tpu_custom_call.1} parent=5 // pred_check
        %p1792 = pneg %p1791
      $region94: #{tpu_custom_call.1} parent=5 // pred_check_branch
        %1794 = sbr.rel (%p1792) target = $region96
      $region95: #{tpu_custom_call.1} parent=5 // pred_region
        %s1795 = ssub.s32 %s24, 2
        // Predicated region
        $region97: #{tpu_custom_call.1} parent=95 // pred_check
          %p1796 = pneg %p273
        $region98: #{tpu_custom_call.1} parent=95 // pred_check_branch
          %1798 = sbr.rel (%p1796) target = $region100
        $region99: #{tpu_custom_call.1} parent=95 // pred_region
          %s1799 = sand.u32 %s258, 1
          %s1800 = scalar_lea.sflag [#allocation7], %s1799
          %s1801 = sand.u32 %s258, 1
          %s1802 = smul.addr %s1801, 32
          %s1803 = scalar_lea.vmem [#allocation10], %s1802
          %1804 = dma.done %s1800, 512
        $region100: #{tpu_custom_call.1} parent=95 // pred_fallthru
          _
      $region96: #{tpu_custom_call.1} parent=5 // pred_fallthru
        _
    $region6: #{tpu_custom_call.1} parent=1 // loop_footer
      %s28 = sadd.s32 1, %s24
    $region7: #{tpu_custom_call.1} parent=1 // loop_footer_branch
      %23 = sbr.rel target = $region3
    $region8: #{tpu_custom_call.1} parent=1 // loop_exit
      _
    %1805 = vsyncpa [#allocation6], 1
    %s1806 = scalar_lea.sflag [#allocation6], 1
    %1807 = vsyncpa %s1806, 1
    %1808 = vsyncpa [#allocation9], 1
    %1809 = vsyncpa [#allocation7], 1
    %s1810 = scalar_lea.sflag [#allocation7], 1
    %1811 = vsyncpa %s1810, 1
    %1812 = vsyncpa [#allocation12], 1

</llo_original>
